<compile_context>
chip_gen: v5e
topology: v5e:2x2
jax: 0.10.0
libtpu: 0.0.40
codegen_flags: <defaults>
</compile_context>

<pallas_src>
import functools

import jax
import jax.numpy as jnp
from jax.experimental import pallas as pl
from jax.experimental.pallas import tpu as pltpu


def _feature_attention_kernel(x_ref, wq_ref, wk_ref, wv_ref,
                              bq_ref, bk_ref, bv_ref,
                              wo_ref, bo_ref, ln_g_ref, ln_b_ref,
                              out_ref, attnw_ref, *, num_heads, eps):
    # One grid step == one batch element.  x_ref block is (1, L, E).
    x = x_ref[0]                                    # (L, E) f32
    L, E = x.shape
    H = num_heads
    hd = E // H
    scale = 1.0 / jnp.sqrt(jnp.float32(hd))

    # --- in-projection (per-head weights prepared in the wrapper) ------------
    # xb: (H, L, E); w_{q,k,v}: (H, E, hd)  ->  q/k/v: (H, L, hd)
    xb = jnp.broadcast_to(x[None], (H, L, E))
    q = jnp.einsum("hle,hed->hld", xb, wq_ref[...],
                   preferred_element_type=jnp.float32) + bq_ref[...]
    k = jnp.einsum("hle,hed->hld", xb, wk_ref[...],
                   preferred_element_type=jnp.float32) + bk_ref[...]
    v = jnp.einsum("hle,hed->hld", xb, wv_ref[...],
                   preferred_element_type=jnp.float32) + bv_ref[...]

    # --- batched scaled-dot-product attention over the head axis -------------
    s = jnp.einsum("hqd,hkd->hqk", q, k,
                   preferred_element_type=jnp.float32) * scale        # (H, L, L)
    s = s - jnp.max(s, axis=-1, keepdims=True)
    p = jnp.exp(s)
    denom = jnp.sum(p, axis=-1, keepdims=True)
    inv = pl.reciprocal(denom, approx=True)          # EUP slot (cheap)
    inv = inv * (2.0 - denom * inv)                  # one Newton step -> ~f32 accuracy
    pr = p * inv                                     # (H, L, L) softmax probs

    ctx = jnp.einsum("hqk,hkd->hqd", pr, v,
                     preferred_element_type=jnp.float32)               # (H, L, hd)

    # --- out-projection: per-head (hd, E) weights, reduced over heads --------
    attn_out = jnp.einsum("hld,hde->hle", ctx, wo_ref[...],
                          preferred_element_type=jnp.float32)          # (H, L, E)
    attn_out = jnp.sum(attn_out, axis=0) + bo_ref[...]                 # (L, E)

    # dropout(p=0.1) == identity in eval mode
    # --- residual + LayerNorm -------------------------------------------------
    y = x + attn_out
    mean = jnp.mean(y, axis=-1, keepdims=True)
    var = jnp.mean((y - mean) ** 2, axis=-1, keepdims=True)
    out = (y - mean) * jax.lax.rsqrt(var + eps) * ln_g_ref[...] + ln_b_ref[...]

    out_ref[0] = out                                 # single full-block store
    attnw_ref[0] = jnp.mean(pr, axis=0)              # head-averaged (L, L)


def feature_attention(x_lne, params, num_heads=4):
    """x_lne: (L, N, E) float32, seq-first (PyTorch MHA default layout)."""
    L, N, E = x_lne.shape
    H = num_heads
    hd = E // H
    x = jnp.transpose(x_lne, (1, 0, 2)).astype(jnp.float32)            # (N, L, E)

    # --- one-time weight preprocessing (plain XLA, outside the kernel) -------
    w_in_t = params["w_in"].T.astype(jnp.float32)                      # (E, 3E)

    def _head_cols(w2d):                                               # (E, E) -> (H, E, hd)
        return w2d.reshape(E, H, hd).transpose(1, 0, 2)

    w_q = _head_cols(w_in_t[:, :E])
    w_k = _head_cols(w_in_t[:, E:2 * E])
    w_v = _head_cols(w_in_t[:, 2 * E:])
    b_in = params["b_in"].astype(jnp.float32)
    b_q = b_in[:E].reshape(H, 1, hd)
    b_k = b_in[E:2 * E].reshape(H, 1, hd)
    b_v = b_in[2 * E:].reshape(H, 1, hd)
    w_o = params["w_out"].T.astype(jnp.float32).reshape(H, hd, E)      # (H, hd, E)
    b_o = params["b_out"].astype(jnp.float32).reshape(1, E)
    ln_g = params["ln_g"].astype(jnp.float32).reshape(1, E)
    ln_b = params["ln_b"].astype(jnp.float32).reshape(1, E)

    def full_spec(shape):
        nd = len(shape)
        return pl.BlockSpec(shape, lambda b, _nd=nd: (0,) * _nd)

    flops = 2 * N * (3 * H * L * E * hd + 2 * H * L * L * hd + H * L * hd * E)
    transcendentals = N * (H * L * L + H * L + L)          # exp + reciprocal + rsqrt
    bytes_accessed = 4 * (x.size + 3 * w_q.size + 3 * b_q.size + w_o.size
                          + b_o.size + ln_g.size + ln_b.size
                          + N * L * E + N * L * L)

    kernel = functools.partial(_feature_attention_kernel,
                               num_heads=num_heads, eps=1e-5)

    out, attnw = pl.pallas_call(
        kernel,
        out_shape=(jax.ShapeDtypeStruct((N, L, E), jnp.float32),
                   jax.ShapeDtypeStruct((N, L, L), jnp.float32)),
        grid=(N,),
        in_specs=[
            pl.BlockSpec((1, L, E), lambda b: (b, 0, 0)),   # x, one batch element
            full_spec((H, E, hd)),                          # W_q per head
            full_spec((H, E, hd)),                          # W_k per head
            full_spec((H, E, hd)),                          # W_v per head
            full_spec((H, 1, hd)),                          # b_q per head
            full_spec((H, 1, hd)),                          # b_k per head
            full_spec((H, 1, hd)),                          # b_v per head
            full_spec((H, hd, E)),                          # W_out per head
            full_spec((1, E)),                              # b_out
            full_spec((1, E)),                              # LN gamma
            full_spec((1, E)),                              # LN beta
        ],
        out_specs=(pl.BlockSpec((1, L, E), lambda b: (b, 0, 0)),
                   pl.BlockSpec((1, L, L), lambda b: (b, 0, 0))),
        compiler_params=pltpu.CompilerParams(
            dimension_semantics=("parallel",)),             # v7x: one batch per TC
        cost_estimate=pl.CostEstimate(flops=int(flops),
                                      transcendentals=int(transcendentals),
                                      bytes_accessed=int(bytes_accessed)),
    )(x, w_q, w_k, w_v, b_q, b_k, b_v, w_o, b_o, ln_g, ln_b)

    return jnp.transpose(out, (1, 0, 2)), attnw             # ((L,N,E), (N,L,L))


def _reference(x_lne, params, num_heads):
    """Plain-JAX reference mirroring nn.MultiheadAttention + LayerNorm (eval)."""
    L, N, E = x_lne.shape
    hd = E // num_heads
    scale = 1.0 / jnp.sqrt(jnp.float32(hd))
    x = jnp.transpose(x_lne, (1, 0, 2))                                  # (N, L, E)
    qkv = x @ params["w_in"].T + params["b_in"]                          # (N, L, 3E)
    q, k, v = qkv[..., :E], qkv[..., E:2 * E], qkv[..., 2 * E:]
    qh = q.reshape(N, L, num_heads, hd).transpose(0, 2, 1, 3)
    kh = k.reshape(N, L, num_heads, hd).transpose(0, 2, 1, 3)
    vh = v.reshape(N, L, num_heads, hd).transpose(0, 2, 1, 3)
    s = jnp.einsum("nhqd,nhkd->nhqk", qh, kh) * scale
    p = jax.nn.softmax(s, axis=-1)
    ctx = jnp.einsum("nhqk,nhkd->nhqd", p, vh).transpose(0, 2, 1, 3).reshape(N, L, E)
    attn_out = ctx @ params["w_out"].T + params["b_out"]
    y = x + attn_out
    mean = y.mean(-1, keepdims=True)
    var = ((y - mean) ** 2).mean(-1, keepdims=True)
    out = (y - mean) / jnp.sqrt(var + 1e-5) * params["ln_g"] + params["ln_b"]
    return jnp.transpose(out, (1, 0, 2)), p.mean(axis=1)


if __name__ == "__main__":
    L, N, E, H = 8, 2, 32, 4                      # seq, batch, feature_dim, heads
    key = jax.random.PRNGKey(0)
    ks = jax.random.split(key, 7)

    x = jax.random.normal(ks[0], (L, N, E), jnp.float32)
    params = {
        "w_in":  jax.random.normal(ks[1], (3 * E, E), jnp.float32) / jnp.sqrt(E),
        "b_in":  0.1 * jax.random.normal(ks[2], (3 * E,), jnp.float32),
        "w_out": jax.random.normal(ks[3], (E, E), jnp.float32) / jnp.sqrt(E),
        "b_out": 0.1 * jax.random.normal(ks[4], (E,), jnp.float32),
        "ln_g":  1.0 + 0.1 * jax.random.normal(ks[5], (E,), jnp.float32),
        "ln_b":  0.1 * jax.random.normal(ks[6], (E,), jnp.float32),
    }

    out, attn_w = feature_attention(x, params, num_heads=H)
    jax.block_until_ready((out, attn_w))

    out_ref, attn_w_ref = _reference(x, params, H)
    assert out.shape == (L, N, E) and attn_w.shape == (N, L, L)
    assert jnp.allclose(out, out_ref, atol=1e-4, rtol=1e-4), "output mismatch"
    assert jnp.allclose(attn_w, attn_w_ref, atol=1e-4, rtol=1e-4), "attn weights mismatch"

    print("KERNEL_OK")
</pallas_src>

<mosaic_0001>
module attributes {stable_mosaic.version = 11 : i64} {
  func.func @_feature_attention_kernel(%arg0: i32, %arg1: memref<1x8x32xf32, #tpu.memory_space<vmem>>, %arg2: memref<4x32x8xf32, #tpu.memory_space<vmem>>, %arg3: memref<4x32x8xf32, #tpu.memory_space<vmem>>, %arg4: memref<4x32x8xf32, #tpu.memory_space<vmem>>, %arg5: memref<4x1x8xf32, #tpu.memory_space<vmem>>, %arg6: memref<4x1x8xf32, #tpu.memory_space<vmem>>, %arg7: memref<4x1x8xf32, #tpu.memory_space<vmem>>, %arg8: memref<4x8x32xf32, #tpu.memory_space<vmem>>, %arg9: memref<1x32xf32, #tpu.memory_space<vmem>>, %arg10: memref<1x32xf32, #tpu.memory_space<vmem>>, %arg11: memref<1x32xf32, #tpu.memory_space<vmem>>, %arg12: memref<1x8x32xf32, #tpu.memory_space<vmem>>, %arg13: memref<1x8x8xf32, #tpu.memory_space<vmem>>) attributes {dimension_semantics = [#tpu.dimension_semantics<parallel>], iteration_bounds = array<i64: 2>, scalar_prefetch = 0 : i64, scratch_operands = 0 : i64, tpu.core_type = #tpu.core_type<tc>, window_params = [{transform_indices = @transform_0, window_bounds = array<i64: 1, 8, 32>}, {pipeline_mode = #tpu.pipeline_mode<synchronous>, transform_indices = @transform_1, window_bounds = array<i64: 4, 32, 8>}, {pipeline_mode = #tpu.pipeline_mode<synchronous>, transform_indices = @transform_2, window_bounds = array<i64: 4, 32, 8>}, {pipeline_mode = #tpu.pipeline_mode<synchronous>, transform_indices = @transform_3, window_bounds = array<i64: 4, 32, 8>}, {pipeline_mode = #tpu.pipeline_mode<synchronous>, transform_indices = @transform_4, window_bounds = array<i64: 4, 1, 8>}, {pipeline_mode = #tpu.pipeline_mode<synchronous>, transform_indices = @transform_5, window_bounds = array<i64: 4, 1, 8>}, {pipeline_mode = #tpu.pipeline_mode<synchronous>, transform_indices = @transform_6, window_bounds = array<i64: 4, 1, 8>}, {pipeline_mode = #tpu.pipeline_mode<synchronous>, transform_indices = @transform_7, window_bounds = array<i64: 4, 8, 32>}, {pipeline_mode = #tpu.pipeline_mode<synchronous>, transform_indices = @transform_8, window_bounds = array<i64: 1, 32>}, {pipeline_mode = #tpu.pipeline_mode<synchronous>, transform_indices = @transform_9, window_bounds = array<i64: 1, 32>}, {pipeline_mode = #tpu.pipeline_mode<synchronous>, transform_indices = @transform_10, window_bounds = array<i64: 1, 32>}, {transform_indices = @transform_11, window_bounds = array<i64: 1, 8, 32>}, {transform_indices = @transform_12, window_bounds = array<i64: 1, 8, 8>}]} {
    %c0 = arith.constant 0 : index
    %c0_0 = arith.constant 0 : index
    %c0_1 = arith.constant 0 : index
    %0 = vector.load %arg1[%c0, %c0_0, %c0_1] : memref<1x8x32xf32, #tpu.memory_space<vmem>>, vector<1x8x32xf32>
    %1 = vector.shape_cast %0 : vector<1x8x32xf32> to vector<8x32xf32>
    %cst = arith.constant 8.000000e+00 : f32
    %2 = math.sqrt %cst : f32
    %cst_2 = arith.constant 1.000000e+00 : f32
    %3 = arith.divf %cst_2, %2 : f32
    %4 = vector.shape_cast %1 : vector<8x32xf32> to vector<1x8x32xf32>
    %5 = vector.shape_cast %4 : vector<1x8x32xf32> to vector<1x8x32xf32>
    %6 = vector.broadcast %5 : vector<1x8x32xf32> to vector<4x8x32xf32>
    %c0_3 = arith.constant 0 : index
    %c0_4 = arith.constant 0 : index
    %c0_5 = arith.constant 0 : index
    %7 = vector.load %arg2[%c0_3, %c0_4, %c0_5] : memref<4x32x8xf32, #tpu.memory_space<vmem>>, vector<4x32x8xf32>
    "tpu.trace_start"() <{level = 10 : i32, message = "hle,hed->hld"}> : () -> ()
    %cst_6 = arith.constant dense<0.000000e+00> : vector<4x8x8xf32>
    %8 = tpu.matmul %6, %7, %cst_6 {dimension_numbers = #tpu.dot_dimension_numbers<[2], [1], [1], [2], [0, 0, 0, 1, 1, 2], [0], [0]>} : vector<4x8x32xf32>, vector<4x32x8xf32>, vector<4x8x8xf32> -> vector<4x8x8xf32>
    "tpu.trace_stop"() : () -> ()
    %c0_7 = arith.constant 0 : index
    %c0_8 = arith.constant 0 : index
    %c0_9 = arith.constant 0 : index
    %9 = vector.load %arg5[%c0_7, %c0_8, %c0_9] : memref<4x1x8xf32, #tpu.memory_space<vmem>>, vector<4x1x8xf32>
    %10 = vector.broadcast %9 : vector<4x1x8xf32> to vector<4x8x8xf32>
    %11 = arith.addf %8, %10 : vector<4x8x8xf32>
    %c0_10 = arith.constant 0 : index
    %c0_11 = arith.constant 0 : index
    %c0_12 = arith.constant 0 : index
    %12 = vector.load %arg3[%c0_10, %c0_11, %c0_12] : memref<4x32x8xf32, #tpu.memory_space<vmem>>, vector<4x32x8xf32>
    "tpu.trace_start"() <{level = 10 : i32, message = "hle,hed->hld"}> : () -> ()
    %cst_13 = arith.constant dense<0.000000e+00> : vector<4x8x8xf32>
    %13 = tpu.matmul %6, %12, %cst_13 {dimension_numbers = #tpu.dot_dimension_numbers<[2], [1], [1], [2], [0, 0, 0, 1, 1, 2], [0], [0]>} : vector<4x8x32xf32>, vector<4x32x8xf32>, vector<4x8x8xf32> -> vector<4x8x8xf32>
    "tpu.trace_stop"() : () -> ()
    %c0_14 = arith.constant 0 : index
    %c0_15 = arith.constant 0 : index
    %c0_16 = arith.constant 0 : index
    %14 = vector.load %arg6[%c0_14, %c0_15, %c0_16] : memref<4x1x8xf32, #tpu.memory_space<vmem>>, vector<4x1x8xf32>
    %15 = vector.broadcast %14 : vector<4x1x8xf32> to vector<4x8x8xf32>
    %16 = arith.addf %13, %15 : vector<4x8x8xf32>
    %c0_17 = arith.constant 0 : index
    %c0_18 = arith.constant 0 : index
    %c0_19 = arith.constant 0 : index
    %17 = vector.load %arg4[%c0_17, %c0_18, %c0_19] : memref<4x32x8xf32, #tpu.memory_space<vmem>>, vector<4x32x8xf32>
    "tpu.trace_start"() <{level = 10 : i32, message = "hle,hed->hld"}> : () -> ()
    %cst_20 = arith.constant dense<0.000000e+00> : vector<4x8x8xf32>
    %18 = tpu.matmul %6, %17, %cst_20 {dimension_numbers = #tpu.dot_dimension_numbers<[2], [1], [1], [2], [0, 0, 0, 1, 1, 2], [0], [0]>} : vector<4x8x32xf32>, vector<4x32x8xf32>, vector<4x8x8xf32> -> vector<4x8x8xf32>
    "tpu.trace_stop"() : () -> ()
    %c0_21 = arith.constant 0 : index
    %c0_22 = arith.constant 0 : index
    %c0_23 = arith.constant 0 : index
    %19 = vector.load %arg7[%c0_21, %c0_22, %c0_23] : memref<4x1x8xf32, #tpu.memory_space<vmem>>, vector<4x1x8xf32>
    %20 = vector.broadcast %19 : vector<4x1x8xf32> to vector<4x8x8xf32>
    %21 = arith.addf %18, %20 : vector<4x8x8xf32>
    "tpu.trace_start"() <{level = 10 : i32, message = "hqd,hkd->hqk"}> : () -> ()
    %cst_24 = arith.constant dense<0.000000e+00> : vector<4x8x8xf32>
    %22 = tpu.matmul %11, %16, %cst_24 {dimension_numbers = #tpu.dot_dimension_numbers<[2], [2], [1], [1], [0, 0, 0, 1, 1, 1], [0], [0]>} : vector<4x8x8xf32>, vector<4x8x8xf32>, vector<4x8x8xf32> -> vector<4x8x8xf32>
    "tpu.trace_stop"() : () -> ()
    %23 = vector.broadcast %3 : f32 to vector<4x8x8xf32>
    %24 = arith.mulf %22, %23 : vector<4x8x8xf32>
    %cst_25 = arith.constant dense<0xFF800000> : vector<4x8xf32>
    %25 = vector.multi_reduction <maximumf>, %24, %cst_25 [2] : vector<4x8x8xf32> to vector<4x8xf32>
    %26 = vector.shape_cast %25 : vector<4x8xf32> to vector<4x8x1xf32>
    %27 = vector.broadcast %26 : vector<4x8x1xf32> to vector<4x8x8xf32>
    %28 = arith.subf %24, %27 : vector<4x8x8xf32>
    %29 = math.exp %28 : vector<4x8x8xf32>
    %cst_26 = arith.constant dense<0.000000e+00> : vector<4x8xf32>
    %30 = vector.multi_reduction <add>, %29, %cst_26 [2] : vector<4x8x8xf32> to vector<4x8xf32>
    %31 = vector.shape_cast %30 : vector<4x8xf32> to vector<4x8x1xf32>
    %32 = tpu.reciprocal %31 {approx = true} : vector<4x8x1xf32> -> vector<4x8x1xf32>
    %33 = arith.mulf %31, %32 : vector<4x8x1xf32>
    %cst_27 = arith.constant 2.000000e+00 : f32
    %34 = vector.broadcast %cst_27 : f32 to vector<4x8x1xf32>
    %35 = arith.subf %34, %33 : vector<4x8x1xf32>
    %36 = arith.mulf %32, %35 : vector<4x8x1xf32>
    %37 = vector.broadcast %36 : vector<4x8x1xf32> to vector<4x8x8xf32>
    %38 = arith.mulf %29, %37 : vector<4x8x8xf32>
    "tpu.trace_start"() <{level = 10 : i32, message = "hqk,hkd->hqd"}> : () -> ()
    %cst_28 = arith.constant dense<0.000000e+00> : vector<4x8x8xf32>
    %39 = tpu.matmul %38, %21, %cst_28 {dimension_numbers = #tpu.dot_dimension_numbers<[2], [1], [1], [2], [0, 0, 0, 1, 1, 2], [0], [0]>} : vector<4x8x8xf32>, vector<4x8x8xf32>, vector<4x8x8xf32> -> vector<4x8x8xf32>
    "tpu.trace_stop"() : () -> ()
    %c0_29 = arith.constant 0 : index
    %c0_30 = arith.constant 0 : index
    %c0_31 = arith.constant 0 : index
    %40 = vector.load %arg8[%c0_29, %c0_30, %c0_31] : memref<4x8x32xf32, #tpu.memory_space<vmem>>, vector<4x8x32xf32>
    "tpu.trace_start"() <{level = 10 : i32, message = "hld,hde->hle"}> : () -> ()
    %cst_32 = arith.constant dense<0.000000e+00> : vector<4x8x32xf32>
    %41 = tpu.matmul %39, %40, %cst_32 {dimension_numbers = #tpu.dot_dimension_numbers<[2], [1], [1], [2], [0, 0, 0, 1, 1, 2], [0], [0]>} : vector<4x8x8xf32>, vector<4x8x32xf32>, vector<4x8x32xf32> -> vector<4x8x32xf32>
    "tpu.trace_stop"() : () -> ()
    %cst_33 = arith.constant dense<0.000000e+00> : vector<8x32xf32>
    %42 = vector.multi_reduction <add>, %41, %cst_33 [0] : vector<4x8x32xf32> to vector<8x32xf32>
    %c0_34 = arith.constant 0 : index
    %c0_35 = arith.constant 0 : index
    %43 = vector.load %arg9[%c0_34, %c0_35] : memref<1x32xf32, #tpu.memory_space<vmem>>, vector<1x32xf32>
    %44 = vector.broadcast %43 : vector<1x32xf32> to vector<8x32xf32>
    %45 = arith.addf %42, %44 : vector<8x32xf32>
    %46 = arith.addf %1, %45 : vector<8x32xf32>
    %cst_36 = arith.constant dense<0.000000e+00> : vector<8xf32>
    %47 = vector.multi_reduction <add>, %46, %cst_36 [1] : vector<8x32xf32> to vector<8xf32>
    %48 = vector.shape_cast %47 : vector<8xf32> to vector<8x1xf32>
    %cst_37 = arith.constant 3.200000e+01 : f32
    %49 = vector.broadcast %cst_37 : f32 to vector<8x1xf32>
    %50 = arith.divf %48, %49 : vector<8x1xf32>
    %51 = vector.broadcast %50 : vector<8x1xf32> to vector<8x32xf32>
    %52 = arith.subf %46, %51 : vector<8x32xf32>
    %53 = arith.mulf %52, %52 : vector<8x32xf32>
    %cst_38 = arith.constant dense<0.000000e+00> : vector<8xf32>
    %54 = vector.multi_reduction <add>, %53, %cst_38 [1] : vector<8x32xf32> to vector<8xf32>
    %55 = vector.shape_cast %54 : vector<8xf32> to vector<8x1xf32>
    %cst_39 = arith.constant 3.200000e+01 : f32
    %56 = vector.broadcast %cst_39 : f32 to vector<8x1xf32>
    %57 = arith.divf %55, %56 : vector<8x1xf32>
    %58 = vector.broadcast %50 : vector<8x1xf32> to vector<8x32xf32>
    %59 = arith.subf %46, %58 : vector<8x32xf32>
    %cst_40 = arith.constant 9.99999974E-6 : f32
    %60 = vector.broadcast %cst_40 : f32 to vector<8x1xf32>
    %61 = arith.addf %57, %60 : vector<8x1xf32>
    %62 = math.rsqrt %61 : vector<8x1xf32>
    %63 = vector.broadcast %62 : vector<8x1xf32> to vector<8x32xf32>
    %64 = arith.mulf %59, %63 : vector<8x32xf32>
    %c0_41 = arith.constant 0 : index
    %c0_42 = arith.constant 0 : index
    %65 = vector.load %arg10[%c0_41, %c0_42] : memref<1x32xf32, #tpu.memory_space<vmem>>, vector<1x32xf32>
    %66 = vector.broadcast %65 : vector<1x32xf32> to vector<8x32xf32>
    %67 = arith.mulf %64, %66 : vector<8x32xf32>
    %c0_43 = arith.constant 0 : index
    %c0_44 = arith.constant 0 : index
    %68 = vector.load %arg11[%c0_43, %c0_44] : memref<1x32xf32, #tpu.memory_space<vmem>>, vector<1x32xf32>
    %69 = vector.broadcast %68 : vector<1x32xf32> to vector<8x32xf32>
    %70 = arith.addf %67, %69 : vector<8x32xf32>
    %c0_45 = arith.constant 0 : index
    %c0_46 = arith.constant 0 : index
    %c0_47 = arith.constant 0 : index
    %71 = vector.load %arg12[%c0_45, %c0_46, %c0_47] : memref<1x8x32xf32, #tpu.memory_space<vmem>>, vector<1x8x32xf32>
    %72 = vector.shape_cast %71 : vector<1x8x32xf32> to vector<8x32xf32>
    %73 = vector.shape_cast %70 : vector<8x32xf32> to vector<1x8x32xf32>
    tpu.vector_store %arg12[%c0_45, %c0_46, %c0_47], %73 {strides = array<i32>} : memref<1x8x32xf32, #tpu.memory_space<vmem>>, vector<1x8x32xf32>,
    %cst_48 = arith.constant dense<0.000000e+00> : vector<8x8xf32>
    %74 = vector.multi_reduction <add>, %38, %cst_48 [0] : vector<4x8x8xf32> to vector<8x8xf32>
    %cst_49 = arith.constant 4.000000e+00 : f32
    %75 = vector.broadcast %cst_49 : f32 to vector<8x8xf32>
    %76 = arith.divf %74, %75 : vector<8x8xf32>
    %c0_50 = arith.constant 0 : index
    %c0_51 = arith.constant 0 : index
    %c0_52 = arith.constant 0 : index
    %77 = vector.load %arg13[%c0_50, %c0_51, %c0_52] : memref<1x8x8xf32, #tpu.memory_space<vmem>>, vector<1x8x8xf32>
    %78 = vector.shape_cast %77 : vector<1x8x8xf32> to vector<8x8xf32>
    %79 = vector.shape_cast %76 : vector<8x8xf32> to vector<1x8x8xf32>
    tpu.vector_store %arg13[%c0_50, %c0_51, %c0_52], %79 {strides = array<i32>} : memref<1x8x8xf32, #tpu.memory_space<vmem>>, vector<1x8x8xf32>,
    return
  }
  func.func @transform_0(%arg0: i32) -> (i32, i32, i32) {
    %c0_i32 = arith.constant 0 : i32
    %c0_i32_0 = arith.constant 0 : i32
    %c0_i32_1 = arith.constant 0 : i32
    return %arg0, %c0_i32, %c0_i32_0 : i32, i32, i32
  }
  func.func @transform_1(%arg0: i32) -> (i32, i32, i32) {
    %c0_i32 = arith.constant 0 : i32
    %c0_i32_0 = arith.constant 0 : i32
    %c0_i32_1 = arith.constant 0 : i32
    %c0_i32_2 = arith.constant 0 : i32
    return %c0_i32, %c0_i32_0, %c0_i32_1 : i32, i32, i32
  }
  func.func @transform_2(%arg0: i32) -> (i32, i32, i32) {
    %c0_i32 = arith.constant 0 : i32
    %c0_i32_0 = arith.constant 0 : i32
    %c0_i32_1 = arith.constant 0 : i32
    %c0_i32_2 = arith.constant 0 : i32
    return %c0_i32, %c0_i32_0, %c0_i32_1 : i32, i32, i32
  }
  func.func @transform_3(%arg0: i32) -> (i32, i32, i32) {
    %c0_i32 = arith.constant 0 : i32
    %c0_i32_0 = arith.constant 0 : i32
    %c0_i32_1 = arith.constant 0 : i32
    %c0_i32_2 = arith.constant 0 : i32
    return %c0_i32, %c0_i32_0, %c0_i32_1 : i32, i32, i32
  }
  func.func @transform_4(%arg0: i32) -> (i32, i32, i32) {
    %c0_i32 = arith.constant 0 : i32
    %c0_i32_0 = arith.constant 0 : i32
    %c0_i32_1 = arith.constant 0 : i32
    %c0_i32_2 = arith.constant 0 : i32
    return %c0_i32, %c0_i32_0, %c0_i32_1 : i32, i32, i32
  }
  func.func @transform_5(%arg0: i32) -> (i32, i32, i32) {
    %c0_i32 = arith.constant 0 : i32
    %c0_i32_0 = arith.constant 0 : i32
    %c0_i32_1 = arith.constant 0 : i32
    %c0_i32_2 = arith.constant 0 : i32
    return %c0_i32, %c0_i32_0, %c0_i32_1 : i32, i32, i32
  }
  func.func @transform_6(%arg0: i32) -> (i32, i32, i32) {
    %c0_i32 = arith.constant 0 : i32
    %c0_i32_0 = arith.constant 0 : i32
    %c0_i32_1 = arith.constant 0 : i32
    %c0_i32_2 = arith.constant 0 : i32
    return %c0_i32, %c0_i32_0, %c0_i32_1 : i32, i32, i32
  }
  func.func @transform_7(%arg0: i32) -> (i32, i32, i32) {
    %c0_i32 = arith.constant 0 : i32
    %c0_i32_0 = arith.constant 0 : i32
    %c0_i32_1 = arith.constant 0 : i32
    %c0_i32_2 = arith.constant 0 : i32
    return %c0_i32, %c0_i32_0, %c0_i32_1 : i32, i32, i32
  }
  func.func @transform_8(%arg0: i32) -> (i32, i32) {
    %c0_i32 = arith.constant 0 : i32
    %c0_i32_0 = arith.constant 0 : i32
    %c0_i32_1 = arith.constant 0 : i32
    return %c0_i32, %c0_i32_0 : i32, i32
  }
  func.func @transform_9(%arg0: i32) -> (i32, i32) {
    %c0_i32 = arith.constant 0 : i32
    %c0_i32_0 = arith.constant 0 : i32
    %c0_i32_1 = arith.constant 0 : i32
    return %c0_i32, %c0_i32_0 : i32, i32
  }
  func.func @transform_10(%arg0: i32) -> (i32, i32) {
    %c0_i32 = arith.constant 0 : i32
    %c0_i32_0 = arith.constant 0 : i32
    %c0_i32_1 = arith.constant 0 : i32
    return %c0_i32, %c0_i32_0 : i32, i32
  }
  func.func @transform_11(%arg0: i32) -> (i32, i32, i32) {
    %c0_i32 = arith.constant 0 : i32
    %c0_i32_0 = arith.constant 0 : i32
    %c0_i32_1 = arith.constant 0 : i32
    return %arg0, %c0_i32, %c0_i32_0 : i32, i32, i32
  }
  func.func @transform_12(%arg0: i32) -> (i32, i32, i32) {
    %c0_i32 = arith.constant 0 : i32
    %c0_i32_0 = arith.constant 0 : i32
    %c0_i32_1 = arith.constant 0 : i32
    return %arg0, %c0_i32, %c0_i32_0 : i32, i32, i32
  }
}

</mosaic_0001>

<llo_original>
// kernel: tpu_custom_call.1
$region0: #{tpu_custom_call.1}
  #allocation0 [shape = 'u32[]', space=smem, size = 0x4, offset = 0x4, fixed_abs, tag = 'smem constant byte address 0x4 - core index']
  #allocation1 [shape = 'u32[72,128]{1,0:T(1,128)}', space=vmem, size = 0x9000, scoped, tag = 'internal scratch']
  %s0 = inlined_call_operand.vmem [shape: f32[2,8,32], index: 0, kind: input, shape index: {}]
  %s1 = inlined_call_operand.vmem [shape: f32[4,32,8], index: 1, kind: input, shape index: {}]
  %s2 = inlined_call_operand.vmem [shape: f32[4,32,8], index: 2, kind: input, shape index: {}]
  %s3 = inlined_call_operand.vmem [shape: f32[4,32,8], index: 3, kind: input, shape index: {}]
  %s4 = inlined_call_operand.vmem [shape: f32[4,1,8], index: 4, kind: input, shape index: {}]
  %s5 = inlined_call_operand.vmem [shape: f32[4,1,8], index: 5, kind: input, shape index: {}]
  %s6 = inlined_call_operand.vmem [shape: f32[4,1,8], index: 6, kind: input, shape index: {}]
  %s7 = inlined_call_operand.vmem [shape: f32[4,8,32], index: 7, kind: input, shape index: {}]
  %s8 = inlined_call_operand.vmem [shape: f32[1,32], index: 8, kind: input, shape index: {}]
  %s9 = inlined_call_operand.vmem [shape: f32[1,32], index: 9, kind: input, shape index: {}]
  %s10 = inlined_call_operand.vmem [shape: f32[1,32], index: 10, kind: input, shape index: {}]
  %s11 = inlined_call_operand.hbm [shape: f32[2,8,32], index: 11, kind: output, shape index: {0}]
  %s12 = inlined_call_operand.hbm [shape: f32[2,8,8], index: 12, kind: output, shape index: {1}]
  %13 = xla_tuple %s11, %s12
  %s14 = sld [smem:[#allocation0]]
  $region85: #{tpu_custom_call.1} parent=0
    _
  %s16 = ssub.s32 1, %s14
  %s17 = scalar_select 0, %s16, %s14
  $region1: #{tpu_custom_call.1} parent=0
    #allocation2 [shape = 'u8[8192]{0}', space=vmem, size = 0x2000, scoped, tag = 'output window, operand 0']
    #allocation3 [shape = 's32[2]{0}', space=sflag, size = 0x8, scoped, tag = 'scoped memory for tpu_custom_call.1']
    #allocation4 [shape = 'u8[8192]{0}', space=vmem, size = 0x2000, scoped, tag = 'output window, operand 1']
    #allocation5 [shape = 's32[2]{0}', space=sflag, size = 0x8, scoped, tag = 'scoped memory for tpu_custom_call.1']
    %18 = vsyncpa [#allocation3], 0
    %s19 = scalar_lea.sflag [#allocation3], 1
    %20 = vsyncpa %s19, 0
    %21 = vsyncpa [#allocation5], 0
    %s22 = scalar_lea.sflag [#allocation5], 1
    %23 = vsyncpa %s22, 0
    loop: start=0, step=1, limit=4
    $region2: #{tpu_custom_call.1} parent=1 // loop_pre_header
      _
    $region3: #{tpu_custom_call.1} parent=1 // loop_header
      %s25 = sphi 0, %s29
      %p26 = scmp.ge.s32.totalorder %s25, 4
      %s35 = sphi 0, %s37
      %s38 = sphi 0, %s35
      %s39 = sphi 0, %s38
      %s55 = sphi 0, %s39
      %s59 = sphi 0, %s59
      %s61 = sphi 0, %s59
      %s62 = sphi 0, %s61
      %s76 = sphi 0, %s62
      %s80 = sphi 0, %s80
      %s82 = sphi 0, %s80
      %s83 = sphi 0, %s82
      %s97 = sphi 0, %s83
      %s101 = sphi 0, %s101
      %s103 = sphi 0, %s101
      %s104 = sphi 0, %s103
      %s118 = sphi 0, %s104
      %s122 = sphi 0, %s122
      %s124 = sphi 0, %s122
      %s125 = sphi 0, %s124
      %s139 = sphi 0, %s125
      %s143 = sphi 0, %s143
      %s145 = sphi 0, %s143
      %s146 = sphi 0, %s145
      %s160 = sphi 0, %s146
      %s164 = sphi 0, %s164
      %s166 = sphi 0, %s164
      %s167 = sphi 0, %s166
      %s181 = sphi 0, %s167
      %s185 = sphi 0, %s185
      %s187 = sphi 0, %s185
      %s188 = sphi 0, %s187
      %s202 = sphi 0, %s188
      %s206 = sphi 0, %s206
      %s208 = sphi 0, %s206
      %s209 = sphi 0, %s208
      %s223 = sphi 0, %s209
      %s227 = sphi 0, %s227
      %s229 = sphi 0, %s227
      %s230 = sphi 0, %s229
      %s244 = sphi 0, %s230
      %s248 = sphi 0, %s248
      %s250 = sphi 0, %s248
      %s251 = sphi 0, %s250
      %s265 = sphi 0, %s251
      %s271 = sphi 0, %s273
      %s274 = sphi 0, %s271
      %s275 = sphi 0, %s274
      %s291 = sphi 0, %s275
      %s297 = sphi 0, %s299
      %s300 = sphi 0, %s297
      %s301 = sphi 0, %s300
      %s317 = sphi 0, %s301
    $region4: #{tpu_custom_call.1} parent=1 // loop_header_branch
      %28 = sbr.rel (%p26) target = $region8
    $region5: #{tpu_custom_call.1} parent=1 // loop_body
      %s30 = ssub.s32 %s25, 1
      %s31 = ssub.s32 %s25, 2
      %s32 = sadd.s32 %s25, 1
      %s33 = ssub.s32 %s25, %s32
      %p34 = scmp.eq.s32.totalorder %s33, 0
      %s36 = sadd.s32 %s35, 1
      %s37 = scalar_select %p34, %s35, %s36
      %p40 = pneg %p34
      %p41 = scmp.eq.s32.totalorder %s25, 1
      %p42 = por %p40, %p41
      %p43 = scmp.ne.s32.totalorder %s35, %s38
      %p44 = scmp.eq.s32.totalorder %s25, 0
      %p45 = por %p43, %p44
      %p46 = scmp.ne.s32.totalorder %s35, %s38
      %p47 = scmp.eq.s32.totalorder %s30, 1
      %p48 = por %p46, %p47
      %p49 = scmp.ne.s32.totalorder %s38, %s39
      %p50 = scmp.eq.s32.totalorder %s30, 0
      %p51 = por %p49, %p50
      %p52 = scmp.ne.s32.totalorder %s38, %s39
      %p53 = scmp.eq.s32.totalorder %s31, 1
      %p54 = por %p52, %p53
      %p56 = scmp.ne.s32.totalorder %s39, %s55
      %p57 = scmp.eq.s32.totalorder %s31, 0
      %p58 = por %p56, %p57
      %s60 = sadd.s32 %s59, 1
      %p63 = scmp.eq.s32.totalorder %s25, 1
      %p64 = scmp.ne.s32.totalorder %s59, %s61
      %p65 = scmp.eq.s32.totalorder %s25, 0
      %p66 = por %p64, %p65
      %p67 = scmp.ne.s32.totalorder %s59, %s61
      %p68 = scmp.eq.s32.totalorder %s30, 1
      %p69 = por %p67, %p68
      %p70 = scmp.ne.s32.totalorder %s61, %s62
      %p71 = scmp.eq.s32.totalorder %s30, 0
      %p72 = por %p70, %p71
      %p73 = scmp.ne.s32.totalorder %s61, %s62
      %p74 = scmp.eq.s32.totalorder %s31, 1
      %p75 = por %p73, %p74
      %p77 = scmp.ne.s32.totalorder %s62, %s76
      %p78 = scmp.eq.s32.totalorder %s31, 0
      %p79 = por %p77, %p78
      %s81 = sadd.s32 %s80, 1
      %p84 = scmp.eq.s32.totalorder %s25, 1
      %p85 = scmp.ne.s32.totalorder %s80, %s82
      %p86 = scmp.eq.s32.totalorder %s25, 0
      %p87 = por %p85, %p86
      %p88 = scmp.ne.s32.totalorder %s80, %s82
      %p89 = scmp.eq.s32.totalorder %s30, 1
      %p90 = por %p88, %p89
      %p91 = scmp.ne.s32.totalorder %s82, %s83
      %p92 = scmp.eq.s32.totalorder %s30, 0
      %p93 = por %p91, %p92
      %p94 = scmp.ne.s32.totalorder %s82, %s83
      %p95 = scmp.eq.s32.totalorder %s31, 1
      %p96 = por %p94, %p95
      %p98 = scmp.ne.s32.totalorder %s83, %s97
      %p99 = scmp.eq.s32.totalorder %s31, 0
      %p100 = por %p98, %p99
      %s102 = sadd.s32 %s101, 1
      %p105 = scmp.eq.s32.totalorder %s25, 1
      %p106 = scmp.ne.s32.totalorder %s101, %s103
      %p107 = scmp.eq.s32.totalorder %s25, 0
      %p108 = por %p106, %p107
      %p109 = scmp.ne.s32.totalorder %s101, %s103
      %p110 = scmp.eq.s32.totalorder %s30, 1
      %p111 = por %p109, %p110
      %p112 = scmp.ne.s32.totalorder %s103, %s104
      %p113 = scmp.eq.s32.totalorder %s30, 0
      %p114 = por %p112, %p113
      %p115 = scmp.ne.s32.totalorder %s103, %s104
      %p116 = scmp.eq.s32.totalorder %s31, 1
      %p117 = por %p115, %p116
      %p119 = scmp.ne.s32.totalorder %s104, %s118
      %p120 = scmp.eq.s32.totalorder %s31, 0
      %p121 = por %p119, %p120
      %s123 = sadd.s32 %s122, 1
      %p126 = scmp.eq.s32.totalorder %s25, 1
      %p127 = scmp.ne.s32.totalorder %s122, %s124
      %p128 = scmp.eq.s32.totalorder %s25, 0
      %p129 = por %p127, %p128
      %p130 = scmp.ne.s32.totalorder %s122, %s124
      %p131 = scmp.eq.s32.totalorder %s30, 1
      %p132 = por %p130, %p131
      %p133 = scmp.ne.s32.totalorder %s124, %s125
      %p134 = scmp.eq.s32.totalorder %s30, 0
      %p135 = por %p133, %p134
      %p136 = scmp.ne.s32.totalorder %s124, %s125
      %p137 = scmp.eq.s32.totalorder %s31, 1
      %p138 = por %p136, %p137
      %p140 = scmp.ne.s32.totalorder %s125, %s139
      %p141 = scmp.eq.s32.totalorder %s31, 0
      %p142 = por %p140, %p141
      %s144 = sadd.s32 %s143, 1
      %p147 = scmp.eq.s32.totalorder %s25, 1
      %p148 = scmp.ne.s32.totalorder %s143, %s145
      %p149 = scmp.eq.s32.totalorder %s25, 0
      %p150 = por %p148, %p149
      %p151 = scmp.ne.s32.totalorder %s143, %s145
      %p152 = scmp.eq.s32.totalorder %s30, 1
      %p153 = por %p151, %p152
      %p154 = scmp.ne.s32.totalorder %s145, %s146
      %p155 = scmp.eq.s32.totalorder %s30, 0
      %p156 = por %p154, %p155
      %p157 = scmp.ne.s32.totalorder %s145, %s146
      %p158 = scmp.eq.s32.totalorder %s31, 1
      %p159 = por %p157, %p158
      %p161 = scmp.ne.s32.totalorder %s146, %s160
      %p162 = scmp.eq.s32.totalorder %s31, 0
      %p163 = por %p161, %p162
      %s165 = sadd.s32 %s164, 1
      %p168 = scmp.eq.s32.totalorder %s25, 1
      %p169 = scmp.ne.s32.totalorder %s164, %s166
      %p170 = scmp.eq.s32.totalorder %s25, 0
      %p171 = por %p169, %p170
      %p172 = scmp.ne.s32.totalorder %s164, %s166
      %p173 = scmp.eq.s32.totalorder %s30, 1
      %p174 = por %p172, %p173
      %p175 = scmp.ne.s32.totalorder %s166, %s167
      %p176 = scmp.eq.s32.totalorder %s30, 0
      %p177 = por %p175, %p176
      %p178 = scmp.ne.s32.totalorder %s166, %s167
      %p179 = scmp.eq.s32.totalorder %s31, 1
      %p180 = por %p178, %p179
      %p182 = scmp.ne.s32.totalorder %s167, %s181
      %p183 = scmp.eq.s32.totalorder %s31, 0
      %p184 = por %p182, %p183
      %s186 = sadd.s32 %s185, 1
      %p189 = scmp.eq.s32.totalorder %s25, 1
      %p190 = scmp.ne.s32.totalorder %s185, %s187
      %p191 = scmp.eq.s32.totalorder %s25, 0
      %p192 = por %p190, %p191
      %p193 = scmp.ne.s32.totalorder %s185, %s187
      %p194 = scmp.eq.s32.totalorder %s30, 1
      %p195 = por %p193, %p194
      %p196 = scmp.ne.s32.totalorder %s187, %s188
      %p197 = scmp.eq.s32.totalorder %s30, 0
      %p198 = por %p196, %p197
      %p199 = scmp.ne.s32.totalorder %s187, %s188
      %p200 = scmp.eq.s32.totalorder %s31, 1
      %p201 = por %p199, %p200
      %p203 = scmp.ne.s32.totalorder %s188, %s202
      %p204 = scmp.eq.s32.totalorder %s31, 0
      %p205 = por %p203, %p204
      %s207 = sadd.s32 %s206, 1
      %p210 = scmp.eq.s32.totalorder %s25, 1
      %p211 = scmp.ne.s32.totalorder %s206, %s208
      %p212 = scmp.eq.s32.totalorder %s25, 0
      %p213 = por %p211, %p212
      %p214 = scmp.ne.s32.totalorder %s206, %s208
      %p215 = scmp.eq.s32.totalorder %s30, 1
      %p216 = por %p214, %p215
      %p217 = scmp.ne.s32.totalorder %s208, %s209
      %p218 = scmp.eq.s32.totalorder %s30, 0
      %p219 = por %p217, %p218
      %p220 = scmp.ne.s32.totalorder %s208, %s209
      %p221 = scmp.eq.s32.totalorder %s31, 1
      %p222 = por %p220, %p221
      %p224 = scmp.ne.s32.totalorder %s209, %s223
      %p225 = scmp.eq.s32.totalorder %s31, 0
      %p226 = por %p224, %p225
      %s228 = sadd.s32 %s227, 1
      %p231 = scmp.eq.s32.totalorder %s25, 1
      %p232 = scmp.ne.s32.totalorder %s227, %s229
      %p233 = scmp.eq.s32.totalorder %s25, 0
      %p234 = por %p232, %p233
      %p235 = scmp.ne.s32.totalorder %s227, %s229
      %p236 = scmp.eq.s32.totalorder %s30, 1
      %p237 = por %p235, %p236
      %p238 = scmp.ne.s32.totalorder %s229, %s230
      %p239 = scmp.eq.s32.totalorder %s30, 0
      %p240 = por %p238, %p239
      %p241 = scmp.ne.s32.totalorder %s229, %s230
      %p242 = scmp.eq.s32.totalorder %s31, 1
      %p243 = por %p241, %p242
      %p245 = scmp.ne.s32.totalorder %s230, %s244
      %p246 = scmp.eq.s32.totalorder %s31, 0
      %p247 = por %p245, %p246
      %s249 = sadd.s32 %s248, 1
      %p252 = scmp.eq.s32.totalorder %s25, 1
      %p253 = scmp.ne.s32.totalorder %s248, %s250
      %p254 = scmp.eq.s32.totalorder %s25, 0
      %p255 = por %p253, %p254
      %p256 = scmp.ne.s32.totalorder %s248, %s250
      %p257 = scmp.eq.s32.totalorder %s30, 1
      %p258 = por %p256, %p257
      %p259 = scmp.ne.s32.totalorder %s250, %s251
      %p260 = scmp.eq.s32.totalorder %s30, 0
      %p261 = por %p259, %p260
      %p262 = scmp.ne.s32.totalorder %s250, %s251
      %p263 = scmp.eq.s32.totalorder %s31, 1
      %p264 = por %p262, %p263
      %p266 = scmp.ne.s32.totalorder %s251, %s265
      %p267 = scmp.eq.s32.totalorder %s31, 0
      %p268 = por %p266, %p267
      %s269 = ssub.s32 %s25, %s32
      %p270 = scmp.eq.s32.totalorder %s269, 0
      %s272 = sadd.s32 %s271, 1
      %s273 = scalar_select %p270, %s271, %s272
      %p276 = pneg %p270
      %p277 = scmp.eq.s32.totalorder %s25, 1
      %p278 = por %p276, %p277
      %p279 = scmp.ne.s32.totalorder %s271, %s274
      %p280 = scmp.eq.s32.totalorder %s25, 0
      %p281 = por %p279, %p280
      %p282 = scmp.ne.s32.totalorder %s271, %s274
      %p283 = scmp.eq.s32.totalorder %s30, 1
      %p284 = por %p282, %p283
      %p285 = scmp.ne.s32.totalorder %s274, %s275
      %p286 = scmp.eq.s32.totalorder %s30, 0
      %p287 = por %p285, %p286
      %p288 = scmp.ne.s32.totalorder %s274, %s275
      %p289 = scmp.eq.s32.totalorder %s31, 1
      %p290 = por %p288, %p289
      %p292 = scmp.ne.s32.totalorder %s275, %s291
      %p293 = scmp.eq.s32.totalorder %s31, 0
      %p294 = por %p292, %p293
      %s295 = ssub.s32 %s25, %s32
      %p296 = scmp.eq.s32.totalorder %s295, 0
      %s298 = sadd.s32 %s297, 1
      %s299 = scalar_select %p296, %s297, %s298
      %p302 = pneg %p296
      %p303 = scmp.eq.s32.totalorder %s25, 1
      %p304 = por %p302, %p303
      %p305 = scmp.ne.s32.totalorder %s297, %s300
      %p306 = scmp.eq.s32.totalorder %s25, 0
      %p307 = por %p305, %p306
      %p308 = scmp.ne.s32.totalorder %s297, %s300
      %p309 = scmp.eq.s32.totalorder %s30, 1
      %p310 = por %p308, %p309
      %p311 = scmp.ne.s32.totalorder %s300, %s301
      %p312 = scmp.eq.s32.totalorder %s30, 0
      %p313 = por %p311, %p312
      %p314 = scmp.ne.s32.totalorder %s300, %s301
      %p315 = scmp.eq.s32.totalorder %s31, 1
      %p316 = por %p314, %p315
      %p318 = scmp.ne.s32.totalorder %s301, %s317
      %p319 = scmp.eq.s32.totalorder %s31, 0
      %p320 = por %p318, %p319
      %p321 = scmp.le.s32.totalorder 1, %s25
      %p322 = scmp.lt.s32.totalorder %s25, 3
      %p323 = pnand %p321, %p322
      %p324 = pneg %p323
      // Predicated region
      $region9: #{tpu_custom_call.1} parent=5 // pred_check
        _
      $region10: #{tpu_custom_call.1} parent=5 // pred_check_branch
        %326 = sbr.rel (%p323) target = $region12
      $region11: #{tpu_custom_call.1} parent=5 // pred_region
        %s327 = ssub.s32 %s25, 1
        // Predicated region
        $region13: #{tpu_custom_call.1} parent=11 // pred_check
          %p328 = pneg %p72
        $region14: #{tpu_custom_call.1} parent=11 // pred_check_branch
          %330 = sbr.rel (%p328) target = $region16
        $region15: #{tpu_custom_call.1} parent=11 // pred_region
          _
        $region16: #{tpu_custom_call.1} parent=11 // pred_fallthru
          _
        // Predicated region
        $region17: #{tpu_custom_call.1} parent=11 // pred_check
          %p331 = pneg %p93
        $region18: #{tpu_custom_call.1} parent=11 // pred_check_branch
          %333 = sbr.rel (%p331) target = $region20
        $region19: #{tpu_custom_call.1} parent=11 // pred_region
          _
        $region20: #{tpu_custom_call.1} parent=11 // pred_fallthru
          _
        // Predicated region
        $region21: #{tpu_custom_call.1} parent=11 // pred_check
          %p334 = pneg %p114
        $region22: #{tpu_custom_call.1} parent=11 // pred_check_branch
          %336 = sbr.rel (%p334) target = $region24
        $region23: #{tpu_custom_call.1} parent=11 // pred_region
          _
        $region24: #{tpu_custom_call.1} parent=11 // pred_fallthru
          _
        // Predicated region
        $region25: #{tpu_custom_call.1} parent=11 // pred_check
          %p337 = pneg %p135
        $region26: #{tpu_custom_call.1} parent=11 // pred_check_branch
          %339 = sbr.rel (%p337) target = $region28
        $region27: #{tpu_custom_call.1} parent=11 // pred_region
          _
        $region28: #{tpu_custom_call.1} parent=11 // pred_fallthru
          _
        // Predicated region
        $region29: #{tpu_custom_call.1} parent=11 // pred_check
          %p340 = pneg %p156
        $region30: #{tpu_custom_call.1} parent=11 // pred_check_branch
          %342 = sbr.rel (%p340) target = $region32
        $region31: #{tpu_custom_call.1} parent=11 // pred_region
          _
        $region32: #{tpu_custom_call.1} parent=11 // pred_fallthru
          _
        // Predicated region
        $region33: #{tpu_custom_call.1} parent=11 // pred_check
          %p343 = pneg %p177
        $region34: #{tpu_custom_call.1} parent=11 // pred_check_branch
          %345 = sbr.rel (%p343) target = $region36
        $region35: #{tpu_custom_call.1} parent=11 // pred_region
          _
        $region36: #{tpu_custom_call.1} parent=11 // pred_fallthru
          _
        // Predicated region
        $region37: #{tpu_custom_call.1} parent=11 // pred_check
          %p346 = pneg %p198
        $region38: #{tpu_custom_call.1} parent=11 // pred_check_branch
          %348 = sbr.rel (%p346) target = $region40
        $region39: #{tpu_custom_call.1} parent=11 // pred_region
          _
        $region40: #{tpu_custom_call.1} parent=11 // pred_fallthru
          _
        // Predicated region
        $region41: #{tpu_custom_call.1} parent=11 // pred_check
          %p349 = pneg %p219
        $region42: #{tpu_custom_call.1} parent=11 // pred_check_branch
          %351 = sbr.rel (%p349) target = $region44
        $region43: #{tpu_custom_call.1} parent=11 // pred_region
          _
        $region44: #{tpu_custom_call.1} parent=11 // pred_fallthru
          _
        // Predicated region
        $region45: #{tpu_custom_call.1} parent=11 // pred_check
          %p352 = pneg %p240
        $region46: #{tpu_custom_call.1} parent=11 // pred_check_branch
          %354 = sbr.rel (%p352) target = $region48
        $region47: #{tpu_custom_call.1} parent=11 // pred_region
          _
        $region48: #{tpu_custom_call.1} parent=11 // pred_fallthru
          _
        // Predicated region
        $region49: #{tpu_custom_call.1} parent=11 // pred_check
          %p355 = pneg %p261
        $region50: #{tpu_custom_call.1} parent=11 // pred_check_branch
          %357 = sbr.rel (%p355) target = $region52
        $region51: #{tpu_custom_call.1} parent=11 // pred_region
          _
        $region52: #{tpu_custom_call.1} parent=11 // pred_fallthru
          _
      $region12: #{tpu_custom_call.1} parent=5 // pred_fallthru
        _
      %p358 = scmp.lt.s32.totalorder %s25, 2
      // Predicated region
      $region53: #{tpu_custom_call.1} parent=5 // pred_check
        %p359 = pneg %p358
      $region54: #{tpu_custom_call.1} parent=5 // pred_check_branch
        %361 = sbr.rel (%p359) target = $region56
      $region55: #{tpu_custom_call.1} parent=5 // pred_region
        // Predicated region
        $region57: #{tpu_custom_call.1} parent=55 // pred_check
          %p362 = pneg %p45
        $region58: #{tpu_custom_call.1} parent=55 // pred_check_branch
          %364 = sbr.rel (%p362) target = $region60
        $region59: #{tpu_custom_call.1} parent=55 // pred_region
          %p365 = scmp.lt.s32.totalorder %s25, 1
          %s366 = scalar_select %p365, %s25, 1
          %s367 = smul.addr %s366, 8
          %s368 = scalar_lea.vmem %s0, %s367
        $region60: #{tpu_custom_call.1} parent=55 // pred_fallthru
          _
      $region56: #{tpu_custom_call.1} parent=5 // pred_fallthru
        _
      %p369 = scmp.le.s32.totalorder 1, %s25
      %p370 = scmp.lt.s32.totalorder %s25, 3
      %p371 = pnand %p369, %p370
      %p372 = pneg %p371
      // Predicated region
      $region61: #{tpu_custom_call.1} parent=5 // pred_check
        _
      $region62: #{tpu_custom_call.1} parent=5 // pred_check_branch
        %374 = sbr.rel (%p371) target = $region64
      $region63: #{tpu_custom_call.1} parent=5 // pred_region
        %s375 = ssub.s32 %s25, 1
        %p376 = scmp.lt.s32.totalorder %s30, 1
        %s377 = scalar_select %p376, %s30, 1
        %s378 = smul.addr %s377, 8
        %s379 = scalar_lea.vmem %s0, %s378
        %p380 = pneg %p51
        %p381 = pneg %p48
        %p382 = pneg %p72
        %p383 = pneg %p69
        %p384 = pneg %p93
        %p385 = pneg %p90
        %p386 = pneg %p114
        %p387 = pneg %p111
        %p388 = pneg %p135
        %p389 = pneg %p132
        %p390 = pneg %p156
        %p391 = pneg %p153
        %p392 = pneg %p177
        %p393 = pneg %p174
        %p394 = pneg %p198
        %p395 = pneg %p195
        %p396 = pneg %p219
        %p397 = pneg %p216
        %p398 = pneg %p240
        %p399 = pneg %p237
        %p400 = pneg %p261
        %p401 = pneg %p258
        %p402 = pneg %p287
        %p403 = pneg %p284
        %s404 = sand.u32 %s274, 1
        %s405 = scalar_lea.sflag [#allocation3], %s404
        %s406 = sand.u32 %s274, 1
        %s407 = smul.addr %s406, 8
        %s408 = scalar_lea.vmem [#allocation2], %s407
        %p409 = pneg %p313
        %p410 = pneg %p310
        %s411 = sand.u32 %s300, 1
        %s412 = scalar_lea.sflag [#allocation5], %s411
        %s413 = sand.u32 %s300, 1
        %s414 = smul.addr %s413, 8
        %s415 = scalar_lea.vmem [#allocation4], %s414
        %p416 = scmp.lt.s32.totalorder %s30, 1
        %s417 = scalar_select %p416, %s30, 1
        %s418 = smul.addr %s417, 8
        %s419 = scalar_lea.vmem %s0, %s418
        %v420 = vld [vmem:[%s419] sm:$0xff]
        %v421 = vld [vmem:[%s1] sm:$0xff]
        %v422 = vld [vmem:[%s1 + $0x8] sm:$0xff]
        %v423 = vld [vmem:[%s1 + $0x10] sm:$0xff]
        %v424 = vld [vmem:[%s1 + $0x18] sm:$0xff]
        %v425 = vld [vmem:[%s1 + $0x20] sm:$0xff]
        %v426 = vld [vmem:[%s1 + $0x28] sm:$0xff]
        %v427 = vld [vmem:[%s1 + $0x30] sm:$0xff]
        %v428 = vld [vmem:[%s1 + $0x38] sm:$0xff]
        %v429 = vld [vmem:[%s1 + $0x40] sm:$0xff]
        %v430 = vld [vmem:[%s1 + $0x48] sm:$0xff]
        %v431 = vld [vmem:[%s1 + $0x50] sm:$0xff]
        %v432 = vld [vmem:[%s1 + $0x58] sm:$0xff]
        %v433 = vld [vmem:[%s1 + $0x60] sm:$0xff]
        %v434 = vld [vmem:[%s1 + $0x68] sm:$0xff]
        %v435 = vld [vmem:[%s1 + $0x70] sm:$0xff]
        %v436 = vld [vmem:[%s1 + $0x78] sm:$0xff]
        %v437 = vld [vmem:[%s4] sm:$0x1]
        %v438 = vld [vmem:[%s4 + $0x1] sm:$0x1]
        %v439 = vld [vmem:[%s4 + $0x2] sm:$0x1]
        %v440 = vld [vmem:[%s4 + $0x3] sm:$0x1]
        %v445 = vperm.slane %v437, 0
        %v446 = vperm.slane %v438, 0
        %v447 = vperm.slane %v439, 0
        %v448 = vperm.slane %v440, 0
        %vm453 = vcmask 261120
        %v455 = vsel %vm453, %v420, 0
        %457 = vmatpush.msra.mxu0 0.0
        %458 = vmatpush.msra.mxu0 0.0
        %459 = vmatpush.msra.mxu0 0.0
        %460 = vmatpush.msra.mxu0 0.0
        %461 = vmatpush.msra.mxu0 0.0
        %462 = vmatpush.msra.mxu0 0.0
        %463 = vmatpush.msra.mxu0 0.0
        %464 = vmatpush.msra.mxu0 0.0
        %465 = vmatpush.msra.mxu0 0.0
        %466 = vmatpush.msra.mxu0 0.0
        %467 = vmatpush.msra.mxu0 0.0
        %468 = vmatpush.msra.mxu0 0.0
        %469 = vmatpush.msra.mxu0 %v424
        %470 = vmatpush.msra.mxu0 %v423
        %471 = vmatpush.msra.mxu0 %v422
        %472 = vmatpush.msra.mxu0 %v421
        %473 = vmatmul.f32.gmra.mxu0 %v455
        %v474 = vpop.f32.mrf.mxu0
        %v475 = vadd.f32 %v445, %v474
        %476 = vdwg.mxu0
        %477 = vmatpush.msra.mxu0 0.0
        %478 = vmatpush.msra.mxu0 0.0
        %479 = vmatpush.msra.mxu0 0.0
        %480 = vmatpush.msra.mxu0 0.0
        %481 = vmatpush.msra.mxu0 0.0
        %482 = vmatpush.msra.mxu0 0.0
        %483 = vmatpush.msra.mxu0 0.0
        %484 = vmatpush.msra.mxu0 0.0
        %485 = vmatpush.msra.mxu0 0.0
        %486 = vmatpush.msra.mxu0 0.0
        %487 = vmatpush.msra.mxu0 0.0
        %488 = vmatpush.msra.mxu0 0.0
        %489 = vmatpush.msra.mxu0 %v428
        %490 = vmatpush.msra.mxu0 %v427
        %491 = vmatpush.msra.mxu0 %v426
        %492 = vmatpush.msra.mxu0 %v425
        %493 = vmatmul.f32.gmra.mxu0 %v455
        %v494 = vpop.f32.mrf.mxu0
        %v495 = vadd.f32 %v446, %v494
        %496 = vdwg.mxu0
        %497 = vmatpush.msra.mxu0 0.0
        %498 = vmatpush.msra.mxu0 0.0
        %499 = vmatpush.msra.mxu0 0.0
        %500 = vmatpush.msra.mxu0 0.0
        %501 = vmatpush.msra.mxu0 0.0
        %502 = vmatpush.msra.mxu0 0.0
        %503 = vmatpush.msra.mxu0 0.0
        %504 = vmatpush.msra.mxu0 0.0
        %505 = vmatpush.msra.mxu0 0.0
        %506 = vmatpush.msra.mxu0 0.0
        %507 = vmatpush.msra.mxu0 0.0
        %508 = vmatpush.msra.mxu0 0.0
        %509 = vmatpush.msra.mxu0 %v432
        %510 = vmatpush.msra.mxu0 %v431
        %511 = vmatpush.msra.mxu0 %v430
        %512 = vmatpush.msra.mxu0 %v429
        %513 = vmatmul.f32.gmra.mxu0 %v455
        %v514 = vpop.f32.mrf.mxu0
        %v515 = vadd.f32 %v447, %v514
        %516 = vdwg.mxu0
        %517 = vmatpush.msra.mxu0 0.0
        %518 = vmatpush.msra.mxu0 0.0
        %519 = vmatpush.msra.mxu0 0.0
        %520 = vmatpush.msra.mxu0 0.0
        %521 = vmatpush.msra.mxu0 0.0
        %522 = vmatpush.msra.mxu0 0.0
        %523 = vmatpush.msra.mxu0 0.0
        %524 = vmatpush.msra.mxu0 0.0
        %525 = vmatpush.msra.mxu0 0.0
        %526 = vmatpush.msra.mxu0 0.0
        %527 = vmatpush.msra.mxu0 0.0
        %528 = vmatpush.msra.mxu0 0.0
        %529 = vmatpush.msra.mxu0 %v436
        %530 = vmatpush.msra.mxu0 %v435
        %531 = vmatpush.msra.mxu0 %v434
        %532 = vmatpush.msra.mxu0 %v433
        %533 = vmatmul.f32.gmra.mxu0 %v455
        %v534 = vpop.f32.mrf.mxu0
        %v535 = vadd.f32 %v448, %v534
        %536 = vdwg.mxu0
        %v537 = vld [vmem:[%s2] sm:$0xff]
        %v538 = vld [vmem:[%s2 + $0x8] sm:$0xff]
        %v539 = vld [vmem:[%s2 + $0x10] sm:$0xff]
        %v540 = vld [vmem:[%s2 + $0x18] sm:$0xff]
        %v541 = vld [vmem:[%s2 + $0x20] sm:$0xff]
        %v542 = vld [vmem:[%s2 + $0x28] sm:$0xff]
        %v543 = vld [vmem:[%s2 + $0x30] sm:$0xff]
        %v544 = vld [vmem:[%s2 + $0x38] sm:$0xff]
        %v545 = vld [vmem:[%s2 + $0x40] sm:$0xff]
        %v546 = vld [vmem:[%s2 + $0x48] sm:$0xff]
        %v547 = vld [vmem:[%s2 + $0x50] sm:$0xff]
        %v548 = vld [vmem:[%s2 + $0x58] sm:$0xff]
        %v549 = vld [vmem:[%s2 + $0x60] sm:$0xff]
        %v550 = vld [vmem:[%s2 + $0x68] sm:$0xff]
        %v551 = vld [vmem:[%s2 + $0x70] sm:$0xff]
        %v552 = vld [vmem:[%s2 + $0x78] sm:$0xff]
        %v553 = vld [vmem:[%s5] sm:$0x1]
        %v554 = vld [vmem:[%s5 + $0x1] sm:$0x1]
        %v555 = vld [vmem:[%s5 + $0x2] sm:$0x1]
        %v556 = vld [vmem:[%s5 + $0x3] sm:$0x1]
        %v561 = vperm.slane %v553, 0
        %v562 = vperm.slane %v554, 0
        %v563 = vperm.slane %v555, 0
        %v564 = vperm.slane %v556, 0
        %569 = vmatpush.msra.mxu0 0.0
        %570 = vmatpush.msra.mxu0 0.0
        %571 = vmatpush.msra.mxu0 0.0
        %572 = vmatpush.msra.mxu0 0.0
        %573 = vmatpush.msra.mxu0 0.0
        %574 = vmatpush.msra.mxu0 0.0
        %575 = vmatpush.msra.mxu0 0.0
        %576 = vmatpush.msra.mxu0 0.0
        %577 = vmatpush.msra.mxu0 0.0
        %578 = vmatpush.msra.mxu0 0.0
        %579 = vmatpush.msra.mxu0 0.0
        %580 = vmatpush.msra.mxu0 0.0
        %581 = vmatpush.msra.mxu0 %v540
        %582 = vmatpush.msra.mxu0 %v539
        %583 = vmatpush.msra.mxu0 %v538
        %584 = vmatpush.msra.mxu0 %v537
        %585 = vmatmul.f32.gmra.mxu0 %v455
        %v586 = vpop.f32.mrf.mxu0
        %v587 = vadd.f32 %v561, %v586
        %588 = vdwg.mxu0
        %589 = vmatpush.msra.mxu0 0.0
        %590 = vmatpush.msra.mxu0 0.0
        %591 = vmatpush.msra.mxu0 0.0
        %592 = vmatpush.msra.mxu0 0.0
        %593 = vmatpush.msra.mxu0 0.0
        %594 = vmatpush.msra.mxu0 0.0
        %595 = vmatpush.msra.mxu0 0.0
        %596 = vmatpush.msra.mxu0 0.0
        %597 = vmatpush.msra.mxu0 0.0
        %598 = vmatpush.msra.mxu0 0.0
        %599 = vmatpush.msra.mxu0 0.0
        %600 = vmatpush.msra.mxu0 0.0
        %601 = vmatpush.msra.mxu0 %v544
        %602 = vmatpush.msra.mxu0 %v543
        %603 = vmatpush.msra.mxu0 %v542
        %604 = vmatpush.msra.mxu0 %v541
        %605 = vmatmul.f32.gmra.mxu0 %v455
        %v606 = vpop.f32.mrf.mxu0
        %v607 = vadd.f32 %v562, %v606
        %608 = vdwg.mxu0
        %609 = vmatpush.msra.mxu0 0.0
        %610 = vmatpush.msra.mxu0 0.0
        %611 = vmatpush.msra.mxu0 0.0
        %612 = vmatpush.msra.mxu0 0.0
        %613 = vmatpush.msra.mxu0 0.0
        %614 = vmatpush.msra.mxu0 0.0
        %615 = vmatpush.msra.mxu0 0.0
        %616 = vmatpush.msra.mxu0 0.0
        %617 = vmatpush.msra.mxu0 0.0
        %618 = vmatpush.msra.mxu0 0.0
        %619 = vmatpush.msra.mxu0 0.0
        %620 = vmatpush.msra.mxu0 0.0
        %621 = vmatpush.msra.mxu0 %v548
        %622 = vmatpush.msra.mxu0 %v547
        %623 = vmatpush.msra.mxu0 %v546
        %624 = vmatpush.msra.mxu0 %v545
        %625 = vmatmul.f32.gmra.mxu0 %v455
        %v626 = vpop.f32.mrf.mxu0
        %v627 = vadd.f32 %v563, %v626
        %628 = vdwg.mxu0
        %629 = vmatpush.msra.mxu0 0.0
        %630 = vmatpush.msra.mxu0 0.0
        %631 = vmatpush.msra.mxu0 0.0
        %632 = vmatpush.msra.mxu0 0.0
        %633 = vmatpush.msra.mxu0 0.0
        %634 = vmatpush.msra.mxu0 0.0
        %635 = vmatpush.msra.mxu0 0.0
        %636 = vmatpush.msra.mxu0 0.0
        %637 = vmatpush.msra.mxu0 0.0
        %638 = vmatpush.msra.mxu0 0.0
        %639 = vmatpush.msra.mxu0 0.0
        %640 = vmatpush.msra.mxu0 0.0
        %641 = vmatpush.msra.mxu0 %v552
        %642 = vmatpush.msra.mxu0 %v551
        %643 = vmatpush.msra.mxu0 %v550
        %644 = vmatpush.msra.mxu0 %v549
        %645 = vmatmul.f32.gmra.mxu0 %v455
        %v646 = vpop.f32.mrf.mxu0
        %v647 = vadd.f32 %v564, %v646
        %648 = vdwg.mxu0
        %v649 = vld [vmem:[%s3] sm:$0xff]
        %v650 = vld [vmem:[%s3 + $0x8] sm:$0xff]
        %v651 = vld [vmem:[%s3 + $0x10] sm:$0xff]
        %v652 = vld [vmem:[%s3 + $0x18] sm:$0xff]
        %v653 = vld [vmem:[%s3 + $0x20] sm:$0xff]
        %v654 = vld [vmem:[%s3 + $0x28] sm:$0xff]
        %v655 = vld [vmem:[%s3 + $0x30] sm:$0xff]
        %v656 = vld [vmem:[%s3 + $0x38] sm:$0xff]
        %v657 = vld [vmem:[%s3 + $0x40] sm:$0xff]
        %v658 = vld [vmem:[%s3 + $0x48] sm:$0xff]
        %v659 = vld [vmem:[%s3 + $0x50] sm:$0xff]
        %v660 = vld [vmem:[%s3 + $0x58] sm:$0xff]
        %v661 = vld [vmem:[%s3 + $0x60] sm:$0xff]
        %v662 = vld [vmem:[%s3 + $0x68] sm:$0xff]
        %v663 = vld [vmem:[%s3 + $0x70] sm:$0xff]
        %v664 = vld [vmem:[%s3 + $0x78] sm:$0xff]
        %v665 = vld [vmem:[%s6] sm:$0x1]
        %v666 = vld [vmem:[%s6 + $0x1] sm:$0x1]
        %v667 = vld [vmem:[%s6 + $0x2] sm:$0x1]
        %v668 = vld [vmem:[%s6 + $0x3] sm:$0x1]
        %v673 = vperm.slane %v665, 0
        %v674 = vperm.slane %v666, 0
        %v675 = vperm.slane %v667, 0
        %v676 = vperm.slane %v668, 0
        %681 = vmatpush.msra.mxu0 0.0
        %682 = vmatpush.msra.mxu0 0.0
        %683 = vmatpush.msra.mxu0 0.0
        %684 = vmatpush.msra.mxu0 0.0
        %685 = vmatpush.msra.mxu0 0.0
        %686 = vmatpush.msra.mxu0 0.0
        %687 = vmatpush.msra.mxu0 0.0
        %688 = vmatpush.msra.mxu0 0.0
        %689 = vmatpush.msra.mxu0 0.0
        %690 = vmatpush.msra.mxu0 0.0
        %691 = vmatpush.msra.mxu0 0.0
        %692 = vmatpush.msra.mxu0 0.0
        %693 = vmatpush.msra.mxu0 %v652
        %694 = vmatpush.msra.mxu0 %v651
        %695 = vmatpush.msra.mxu0 %v650
        %696 = vmatpush.msra.mxu0 %v649
        %697 = vmatmul.f32.gmra.mxu0 %v455
        %v698 = vpop.f32.mrf.mxu0
        %v699 = vadd.f32 %v673, %v698
        %700 = vdwg.mxu0
        %701 = vmatpush.msra.mxu0 0.0
        %702 = vmatpush.msra.mxu0 0.0
        %703 = vmatpush.msra.mxu0 0.0
        %704 = vmatpush.msra.mxu0 0.0
        %705 = vmatpush.msra.mxu0 0.0
        %706 = vmatpush.msra.mxu0 0.0
        %707 = vmatpush.msra.mxu0 0.0
        %708 = vmatpush.msra.mxu0 0.0
        %709 = vmatpush.msra.mxu0 0.0
        %710 = vmatpush.msra.mxu0 0.0
        %711 = vmatpush.msra.mxu0 0.0
        %712 = vmatpush.msra.mxu0 0.0
        %713 = vmatpush.msra.mxu0 %v656
        %714 = vmatpush.msra.mxu0 %v655
        %715 = vmatpush.msra.mxu0 %v654
        %716 = vmatpush.msra.mxu0 %v653
        %717 = vmatmul.f32.gmra.mxu0 %v455
        %v718 = vpop.f32.mrf.mxu0
        %v719 = vadd.f32 %v674, %v718
        %720 = vdwg.mxu0
        %721 = vmatpush.msra.mxu0 0.0
        %722 = vmatpush.msra.mxu0 0.0
        %723 = vmatpush.msra.mxu0 0.0
        %724 = vmatpush.msra.mxu0 0.0
        %725 = vmatpush.msra.mxu0 0.0
        %726 = vmatpush.msra.mxu0 0.0
        %727 = vmatpush.msra.mxu0 0.0
        %728 = vmatpush.msra.mxu0 0.0
        %729 = vmatpush.msra.mxu0 0.0
        %730 = vmatpush.msra.mxu0 0.0
        %731 = vmatpush.msra.mxu0 0.0
        %732 = vmatpush.msra.mxu0 0.0
        %733 = vmatpush.msra.mxu0 %v660
        %734 = vmatpush.msra.mxu0 %v659
        %735 = vmatpush.msra.mxu0 %v658
        %736 = vmatpush.msra.mxu0 %v657
        %737 = vmatmul.f32.gmra.mxu0 %v455
        %v738 = vpop.f32.mrf.mxu0
        %v739 = vadd.f32 %v675, %v738
        %740 = vdwg.mxu0
        %741 = vmatpush.msra.mxu0 0.0
        %742 = vmatpush.msra.mxu0 0.0
        %743 = vmatpush.msra.mxu0 0.0
        %744 = vmatpush.msra.mxu0 0.0
        %745 = vmatpush.msra.mxu0 0.0
        %746 = vmatpush.msra.mxu0 0.0
        %747 = vmatpush.msra.mxu0 0.0
        %748 = vmatpush.msra.mxu0 0.0
        %749 = vmatpush.msra.mxu0 0.0
        %750 = vmatpush.msra.mxu0 0.0
        %751 = vmatpush.msra.mxu0 0.0
        %752 = vmatpush.msra.mxu0 0.0
        %753 = vmatpush.msra.mxu0 %v664
        %754 = vmatpush.msra.mxu0 %v663
        %755 = vmatpush.msra.mxu0 %v662
        %756 = vmatpush.msra.mxu0 %v661
        %757 = vmatmul.f32.gmra.mxu0 %v455
        %v758 = vpop.f32.mrf.mxu0
        %v759 = vadd.f32 %v676, %v758
        %760 = vdwg.mxu0
        %vm761 = vcmask 64512
        %v763 = vsel %vm761, %v475, 0
        %v766 = vsel %vm761, %v587, 0
        %768 = vmatpush.xpose.msra.mxu0 0.0
        %769 = vmatpush.xpose.msra.mxu0 0.0
        %770 = vmatpush.xpose.msra.mxu0 0.0
        %771 = vmatpush.xpose.msra.mxu0 0.0
        %772 = vmatpush.xpose.msra.mxu0 0.0
        %773 = vmatpush.xpose.msra.mxu0 0.0
        %774 = vmatpush.xpose.msra.mxu0 0.0
        %775 = vmatpush.xpose.msra.mxu0 0.0
        %776 = vmatpush.xpose.msra.mxu0 0.0
        %777 = vmatpush.xpose.msra.mxu0 0.0
        %778 = vmatpush.xpose.msra.mxu0 0.0
        %779 = vmatpush.xpose.msra.mxu0 0.0
        %780 = vmatpush.xpose.msra.mxu0 0.0
        %781 = vmatpush.xpose.msra.mxu0 0.0
        %782 = vmatpush.xpose.msra.mxu0 0.0
        %783 = vmatpush.xpose.msra.mxu0 %v766
        %784 = vmatmul.f32.gmra.mxu0 %v763
        %v785 = vpop.f32.mrf.mxu0
        %v786 = vadd.f32 0.0, %v785
        %787 = vdwg.mxu0
        %v789 = vsel %vm761, %v495, 0
        %v792 = vsel %vm761, %v607, 0
        %794 = vmatpush.xpose.msra.mxu0 0.0
        %795 = vmatpush.xpose.msra.mxu0 0.0
        %796 = vmatpush.xpose.msra.mxu0 0.0
        %797 = vmatpush.xpose.msra.mxu0 0.0
        %798 = vmatpush.xpose.msra.mxu0 0.0
        %799 = vmatpush.xpose.msra.mxu0 0.0
        %800 = vmatpush.xpose.msra.mxu0 0.0
        %801 = vmatpush.xpose.msra.mxu0 0.0
        %802 = vmatpush.xpose.msra.mxu0 0.0
        %803 = vmatpush.xpose.msra.mxu0 0.0
        %804 = vmatpush.xpose.msra.mxu0 0.0
        %805 = vmatpush.xpose.msra.mxu0 0.0
        %806 = vmatpush.xpose.msra.mxu0 0.0
        %807 = vmatpush.xpose.msra.mxu0 0.0
        %808 = vmatpush.xpose.msra.mxu0 0.0
        %809 = vmatpush.xpose.msra.mxu0 %v792
        %810 = vmatmul.f32.gmra.mxu0 %v789
        %v811 = vpop.f32.mrf.mxu0
        %v812 = vadd.f32 0.0, %v811
        %813 = vdwg.mxu0
        %v815 = vsel %vm761, %v515, 0
        %v818 = vsel %vm761, %v627, 0
        %820 = vmatpush.xpose.msra.mxu0 0.0
        %821 = vmatpush.xpose.msra.mxu0 0.0
        %822 = vmatpush.xpose.msra.mxu0 0.0
        %823 = vmatpush.xpose.msra.mxu0 0.0
        %824 = vmatpush.xpose.msra.mxu0 0.0
        %825 = vmatpush.xpose.msra.mxu0 0.0
        %826 = vmatpush.xpose.msra.mxu0 0.0
        %827 = vmatpush.xpose.msra.mxu0 0.0
        %828 = vmatpush.xpose.msra.mxu0 0.0
        %829 = vmatpush.xpose.msra.mxu0 0.0
        %830 = vmatpush.xpose.msra.mxu0 0.0
        %831 = vmatpush.xpose.msra.mxu0 0.0
        %832 = vmatpush.xpose.msra.mxu0 0.0
        %833 = vmatpush.xpose.msra.mxu0 0.0
        %834 = vmatpush.xpose.msra.mxu0 0.0
        %835 = vmatpush.xpose.msra.mxu0 %v818
        %836 = vmatmul.f32.gmra.mxu0 %v815
        %v837 = vpop.f32.mrf.mxu0
        %v838 = vadd.f32 0.0, %v837
        %839 = vdwg.mxu0
        %v841 = vsel %vm761, %v535, 0
        %v844 = vsel %vm761, %v647, 0
        %846 = vmatpush.xpose.msra.mxu0 0.0
        %847 = vmatpush.xpose.msra.mxu0 0.0
        %848 = vmatpush.xpose.msra.mxu0 0.0
        %849 = vmatpush.xpose.msra.mxu0 0.0
        %850 = vmatpush.xpose.msra.mxu0 0.0
        %851 = vmatpush.xpose.msra.mxu0 0.0
        %852 = vmatpush.xpose.msra.mxu0 0.0
        %853 = vmatpush.xpose.msra.mxu0 0.0
        %854 = vmatpush.xpose.msra.mxu0 0.0
        %855 = vmatpush.xpose.msra.mxu0 0.0
        %856 = vmatpush.xpose.msra.mxu0 0.0
        %857 = vmatpush.xpose.msra.mxu0 0.0
        %858 = vmatpush.xpose.msra.mxu0 0.0
        %859 = vmatpush.xpose.msra.mxu0 0.0
        %860 = vmatpush.xpose.msra.mxu0 0.0
        %861 = vmatpush.xpose.msra.mxu0 %v844
        %862 = vmatmul.f32.gmra.mxu0 %v841
        %v863 = vpop.f32.mrf.mxu0
        %v864 = vadd.f32 0.0, %v863
        %865 = vdwg.mxu0
        %v866 = vmul.f32 %v786, 0.35355338
        %v867 = vmul.f32 %v812, 0.35355338
        %v868 = vmul.f32 %v838, 0.35355338
        %v869 = vmul.f32 %v864, 0.35355338
        %v870 = vsel %vm761, %v866, -inf
        %871 = vmax.xlane.f32.xlu0 %v870
        %v872 = vpop.xlane.xlu0 %871
        %v873 = vsel %vm761, %v867, -inf
        %874 = vmax.xlane.f32.xlu0 %v873
        %v875 = vpop.xlane.xlu0 %874
        %v876 = vsel %vm761, %v868, -inf
        %877 = vmax.xlane.f32.xlu0 %v876
        %v878 = vpop.xlane.xlu0 %877
        %v879 = vsel %vm761, %v869, -inf
        %880 = vmax.xlane.f32.xlu0 %v879
        %v881 = vpop.xlane.xlu0 %880
        %v882 = vsub.f32 %v866, %v872
        %v883 = vsub.f32 %v867, %v875
        %v884 = vsub.f32 %v868, %v878
        %v885 = vsub.f32 %v869, %v881
        %v886 = vmul.f32 %v882, 1.442695
        %v887 = vpow.pop %v886
        %v888 = vmul.f32 %v883, 1.442695
        %v889 = vpow.pop %v888
        %v890 = vmul.f32 %v884, 1.442695
        %v891 = vpow.pop %v890
        %v892 = vmul.f32 %v885, 1.442695
        %v893 = vpow.pop %v892
        %v894 = vsel %vm761, %v887, 0.0
        %895 = vadd.xlane.f32.xlu0 %v894
        %v896 = vpop.xlane.xlu0 %895
        %v897 = vsel %vm761, %v889, 0.0
        %898 = vadd.xlane.f32.xlu0 %v897
        %v899 = vpop.xlane.xlu0 %898
        %v900 = vsel %vm761, %v891, 0.0
        %901 = vadd.xlane.f32.xlu0 %v900
        %v902 = vpop.xlane.xlu0 %901
        %v903 = vsel %vm761, %v893, 0.0
        %904 = vadd.xlane.f32.xlu0 %v903
        %v905 = vpop.xlane.xlu0 %904
        %v906 = vrcp.pop %v896
        %v907 = vrcp.pop %v899
        %v908 = vrcp.pop %v902
        %v909 = vrcp.pop %v905
        %v910 = vmul.f32 %v896, %v906
        %v911 = vmul.f32 %v899, %v907
        %v912 = vmul.f32 %v902, %v908
        %v913 = vmul.f32 %v905, %v909
        %v914 = vsub.f32 2.0, %v910
        %v915 = vsub.f32 2.0, %v911
        %v916 = vsub.f32 2.0, %v912
        %v917 = vsub.f32 2.0, %v913
        %v918 = vmul.f32 %v906, %v914
        %v919 = vmul.f32 %v907, %v915
        %v920 = vmul.f32 %v908, %v916
        %v921 = vmul.f32 %v909, %v917
        %v922 = vmul.f32 %v887, %v918
        %v923 = vmul.f32 %v889, %v919
        %v924 = vmul.f32 %v891, %v920
        %v925 = vmul.f32 %v893, %v921
        %v927 = vsel %vm761, %v922, 0
        %929 = vmatpush.msra.mxu0 0.0
        %930 = vmatpush.msra.mxu0 0.0
        %931 = vmatpush.msra.mxu0 0.0
        %932 = vmatpush.msra.mxu0 0.0
        %933 = vmatpush.msra.mxu0 0.0
        %934 = vmatpush.msra.mxu0 0.0
        %935 = vmatpush.msra.mxu0 0.0
        %936 = vmatpush.msra.mxu0 0.0
        %937 = vmatpush.msra.mxu0 0.0
        %938 = vmatpush.msra.mxu0 0.0
        %939 = vmatpush.msra.mxu0 0.0
        %940 = vmatpush.msra.mxu0 0.0
        %941 = vmatpush.msra.mxu0 0.0
        %942 = vmatpush.msra.mxu0 0.0
        %943 = vmatpush.msra.mxu0 0.0
        %944 = vmatpush.msra.mxu0 %v699
        %945 = vmatmul.f32.gmra.mxu0 %v927
        %v946 = vpop.f32.mrf.mxu0
        %v947 = vadd.f32 0.0, %v946
        %948 = vdwg.mxu0
        %v950 = vsel %vm761, %v923, 0
        %952 = vmatpush.msra.mxu0 0.0
        %953 = vmatpush.msra.mxu0 0.0
        %954 = vmatpush.msra.mxu0 0.0
        %955 = vmatpush.msra.mxu0 0.0
        %956 = vmatpush.msra.mxu0 0.0
        %957 = vmatpush.msra.mxu0 0.0
        %958 = vmatpush.msra.mxu0 0.0
        %959 = vmatpush.msra.mxu0 0.0
        %960 = vmatpush.msra.mxu0 0.0
        %961 = vmatpush.msra.mxu0 0.0
        %962 = vmatpush.msra.mxu0 0.0
        %963 = vmatpush.msra.mxu0 0.0
        %964 = vmatpush.msra.mxu0 0.0
        %965 = vmatpush.msra.mxu0 0.0
        %966 = vmatpush.msra.mxu0 0.0
        %967 = vmatpush.msra.mxu0 %v719
        %968 = vmatmul.f32.gmra.mxu0 %v950
        %v969 = vpop.f32.mrf.mxu0
        %v970 = vadd.f32 0.0, %v969
        %971 = vdwg.mxu0
        %v973 = vsel %vm761, %v924, 0
        %975 = vmatpush.msra.mxu0 0.0
        %976 = vmatpush.msra.mxu0 0.0
        %977 = vmatpush.msra.mxu0 0.0
        %978 = vmatpush.msra.mxu0 0.0
        %979 = vmatpush.msra.mxu0 0.0
        %980 = vmatpush.msra.mxu0 0.0
        %981 = vmatpush.msra.mxu0 0.0
        %982 = vmatpush.msra.mxu0 0.0
        %983 = vmatpush.msra.mxu0 0.0
        %984 = vmatpush.msra.mxu0 0.0
        %985 = vmatpush.msra.mxu0 0.0
        %986 = vmatpush.msra.mxu0 0.0
        %987 = vmatpush.msra.mxu0 0.0
        %988 = vmatpush.msra.mxu0 0.0
        %989 = vmatpush.msra.mxu0 0.0
        %990 = vmatpush.msra.mxu0 %v739
        %991 = vmatmul.f32.gmra.mxu0 %v973
        %v992 = vpop.f32.mrf.mxu0
        %v993 = vadd.f32 0.0, %v992
        %994 = vdwg.mxu0
        %v996 = vsel %vm761, %v925, 0
        %998 = vmatpush.msra.mxu0 0.0
        %999 = vmatpush.msra.mxu0 0.0
        %1000 = vmatpush.msra.mxu0 0.0
        %1001 = vmatpush.msra.mxu0 0.0
        %1002 = vmatpush.msra.mxu0 0.0
        %1003 = vmatpush.msra.mxu0 0.0
        %1004 = vmatpush.msra.mxu0 0.0
        %1005 = vmatpush.msra.mxu0 0.0
        %1006 = vmatpush.msra.mxu0 0.0
        %1007 = vmatpush.msra.mxu0 0.0
        %1008 = vmatpush.msra.mxu0 0.0
        %1009 = vmatpush.msra.mxu0 0.0
        %1010 = vmatpush.msra.mxu0 0.0
        %1011 = vmatpush.msra.mxu0 0.0
        %1012 = vmatpush.msra.mxu0 0.0
        %1013 = vmatpush.msra.mxu0 %v759
        %1014 = vmatmul.f32.gmra.mxu0 %v996
        %v1015 = vpop.f32.mrf.mxu0
        %v1016 = vadd.f32 0.0, %v1015
        %1017 = vdwg.mxu0
        %v1018 = vld [vmem:[%s7] sm:$0xff]
        %v1019 = vld [vmem:[%s7 + $0x8] sm:$0xff]
        %v1020 = vld [vmem:[%s7 + $0x10] sm:$0xff]
        %v1021 = vld [vmem:[%s7 + $0x18] sm:$0xff]
        %v1023 = vsel %vm761, %v947, 0
        %1025 = vmatpush.msra.mxu0 0.0
        %1026 = vmatpush.msra.mxu0 0.0
        %1027 = vmatpush.msra.mxu0 0.0
        %1028 = vmatpush.msra.mxu0 0.0
        %1029 = vmatpush.msra.mxu0 0.0
        %1030 = vmatpush.msra.mxu0 0.0
        %1031 = vmatpush.msra.mxu0 0.0
        %1032 = vmatpush.msra.mxu0 0.0
        %1033 = vmatpush.msra.mxu0 0.0
        %1034 = vmatpush.msra.mxu0 0.0
        %1035 = vmatpush.msra.mxu0 0.0
        %1036 = vmatpush.msra.mxu0 0.0
        %1037 = vmatpush.msra.mxu0 0.0
        %1038 = vmatpush.msra.mxu0 0.0
        %1039 = vmatpush.msra.mxu0 0.0
        %1040 = vmatpush.msra.mxu0 %v1018
        %1041 = vmatmul.f32.gmra.mxu0 %v1023
        %v1042 = vpop.f32.mrf.mxu0
        %v1043 = vadd.f32 0.0, %v1042
        %1044 = vdwg.mxu0
        %v1046 = vsel %vm761, %v970, 0
        %1048 = vmatpush.msra.mxu0 0.0
        %1049 = vmatpush.msra.mxu0 0.0
        %1050 = vmatpush.msra.mxu0 0.0
        %1051 = vmatpush.msra.mxu0 0.0
        %1052 = vmatpush.msra.mxu0 0.0
        %1053 = vmatpush.msra.mxu0 0.0
        %1054 = vmatpush.msra.mxu0 0.0
        %1055 = vmatpush.msra.mxu0 0.0
        %1056 = vmatpush.msra.mxu0 0.0
        %1057 = vmatpush.msra.mxu0 0.0
        %1058 = vmatpush.msra.mxu0 0.0
        %1059 = vmatpush.msra.mxu0 0.0
        %1060 = vmatpush.msra.mxu0 0.0
        %1061 = vmatpush.msra.mxu0 0.0
        %1062 = vmatpush.msra.mxu0 0.0
        %1063 = vmatpush.msra.mxu0 %v1019
        %1064 = vmatmul.f32.gmra.mxu0 %v1046
        %v1065 = vpop.f32.mrf.mxu0
        %v1066 = vadd.f32 0.0, %v1065
        %1067 = vdwg.mxu0
        %v1069 = vsel %vm761, %v993, 0
        %1071 = vmatpush.msra.mxu0 0.0
        %1072 = vmatpush.msra.mxu0 0.0
        %1073 = vmatpush.msra.mxu0 0.0
        %1074 = vmatpush.msra.mxu0 0.0
        %1075 = vmatpush.msra.mxu0 0.0
        %1076 = vmatpush.msra.mxu0 0.0
        %1077 = vmatpush.msra.mxu0 0.0
        %1078 = vmatpush.msra.mxu0 0.0
        %1079 = vmatpush.msra.mxu0 0.0
        %1080 = vmatpush.msra.mxu0 0.0
        %1081 = vmatpush.msra.mxu0 0.0
        %1082 = vmatpush.msra.mxu0 0.0
        %1083 = vmatpush.msra.mxu0 0.0
        %1084 = vmatpush.msra.mxu0 0.0
        %1085 = vmatpush.msra.mxu0 0.0
        %1086 = vmatpush.msra.mxu0 %v1020
        %1087 = vmatmul.f32.gmra.mxu0 %v1069
        %v1088 = vpop.f32.mrf.mxu0
        %v1089 = vadd.f32 0.0, %v1088
        %1090 = vdwg.mxu0
        %v1092 = vsel %vm761, %v1016, 0
        %1094 = vmatpush.msra.mxu0 0.0
        %1095 = vmatpush.msra.mxu0 0.0
        %1096 = vmatpush.msra.mxu0 0.0
        %1097 = vmatpush.msra.mxu0 0.0
        %1098 = vmatpush.msra.mxu0 0.0
        %1099 = vmatpush.msra.mxu0 0.0
        %1100 = vmatpush.msra.mxu0 0.0
        %1101 = vmatpush.msra.mxu0 0.0
        %1102 = vmatpush.msra.mxu0 0.0
        %1103 = vmatpush.msra.mxu0 0.0
        %1104 = vmatpush.msra.mxu0 0.0
        %1105 = vmatpush.msra.mxu0 0.0
        %1106 = vmatpush.msra.mxu0 0.0
        %1107 = vmatpush.msra.mxu0 0.0
        %1108 = vmatpush.msra.mxu0 0.0
        %1109 = vmatpush.msra.mxu0 %v1021
        %1110 = vmatmul.f32.gmra.mxu0 %v1092
        %v1111 = vpop.f32.mrf.mxu0
        %v1112 = vadd.f32 0.0, %v1111
        %1113 = vdwg.mxu0
        %v1114 = vsel %vm453, %v1043, 0.0
        %v1115 = vsel %vm453, %v1066, 0.0
        %v1116 = vadd.f32 %v1114, %v1115
        %v1117 = vsel %vm453, %v1089, 0.0
        %v1118 = vadd.f32 %v1116, %v1117
        %v1119 = vsel %vm453, %v1112, 0.0
        %v1120 = vadd.f32 %v1118, %v1119
        %v1121 = vld [vmem:[%s8] sm:$0x1]
        %v1123 = vperm.slane %v1121, 0
        %v1125 = vadd.f32 %v1120, %v1123
        %v1126 = vadd.f32 %v420, %v1125
        %v1127 = vsel %vm453, %v1126, 0.0
        %1128 = vadd.xlane.f32.xlu0 %v1127
        %v1129 = vpop.xlane.xlu0 %1128
        %v1130 = vrcp.pop 32.0
        %v1131 = vmul.f32 32.0, %v1130
        %v1132 = vsub.f32 1.0, %v1131
        %v1133 = vmul.f32 %v1130, %v1132
        %v1134 = vadd.f32 %v1130, %v1133
        %vm1135 = vweird.f32 %v1130
        %v1136 = vsel %vm1135, %v1130, %v1134
        %v1137 = vmul.f32 %v1129, %v1136
        %v1138 = vsub.f32 %v1126, %v1137
        %v1139 = vmul.f32 %v1138, %v1138
        %v1140 = vsel %vm453, %v1139, 0.0
        %1141 = vadd.xlane.f32.xlu0 %v1140
        %v1142 = vpop.xlane.xlu0 %1141
        %v1143 = vmul.f32 %v1142, %v1136
        %v1144 = vadd.f32 %v1143, 1e-05
        %v1145 = vrsqrt.pop %v1144
        %v1146 = vmul.f32 %v1145, %v1144
        %v1147 = vmul.f32 %v1146, %v1145
        %v1148 = vmul.f32 0.5, %v1147
        %v1149 = vsub.f32 1.5, %v1148
        %v1150 = vmul.f32 %v1145, %v1149
        %vm1151 = vweird.f32 %v1144
        %vm1152 = vweird.f32 %v1145
        %vm1153 = vmor %vm1151, %vm1152
        %v1154 = vsel %vm1153, %v1145, %v1150
        %v1155 = vmul.f32 %v1138, %v1154
        %v1156 = vld [vmem:[%s9] sm:$0x1]
        %v1158 = vperm.slane %v1156, 0
        %v1160 = vmul.f32 %v1155, %v1158
        %v1161 = vld [vmem:[%s10] sm:$0x1]
        %v1163 = vperm.slane %v1161, 0
        %v1165 = vadd.f32 %v1160, %v1163
        %1166 = vst.msk [vmem:[%s408] sm:$0xff] %vm453, %v1165
        %v1167 = vsel %vm761, %v922, 0.0
        %v1168 = vsel %vm761, %v923, 0.0
        %v1169 = vadd.f32 %v1167, %v1168
        %v1170 = vsel %vm761, %v924, 0.0
        %v1171 = vadd.f32 %v1169, %v1170
        %v1172 = vsel %vm761, %v925, 0.0
        %v1173 = vadd.f32 %v1171, %v1172
        %v1174 = vrcp.pop 4.0
        %v1175 = vmul.f32 4.0, %v1174
        %v1176 = vsub.f32 1.0, %v1175
        %v1177 = vmul.f32 %v1174, %v1176
        %v1178 = vadd.f32 %v1174, %v1177
        %vm1179 = vweird.f32 %v1174
        %v1180 = vsel %vm1179, %v1174, %v1178
        %v1181 = vmul.f32 %v1173, %v1180
        %1182 = vst.msk [vmem:[%s415] sm:$0xff] %vm761, %v1181
        %s1183 = sand.u32 %s274, 1
        %s1184 = scalar_lea.sflag [#allocation3], %s1183
        %s1185 = sand.u32 %s274, 1
        %s1186 = smul.addr %s1185, 8
        %s1187 = scalar_lea.vmem [#allocation2], %s1186
        %s1188 = sand.u32 %s300, 1
        %s1189 = scalar_lea.sflag [#allocation5], %s1188
        %s1190 = sand.u32 %s300, 1
        %s1191 = smul.addr %s1190, 8
        %s1192 = scalar_lea.vmem [#allocation4], %s1191
        // Predicated region
        $region65: #{tpu_custom_call.1} parent=63 // pred_check
          %p1193 = pneg %p284
        $region66: #{tpu_custom_call.1} parent=63 // pred_check_branch
          %1195 = sbr.rel (%p1193) target = $region68
        $region67: #{tpu_custom_call.1} parent=63 // pred_region
          %1197 = vsyncadd %s1184, 0
          %s1198 = smul.addr %s30, 8
          %s1199 = scalar_lea.hbm %s11, %s1198
          %s1201 = sshll.u32 %s1187, 4
          %s1202 = int_to_ptr.vmem [resolvable:$true] %s1201
          %s1203 = sshll.u32 %s1199, 4
          %s1204 = int_to_ptr.hbm [resolvable:$true] %s1203
          %1206 = dma.vmem_to_hbm [thread:$0]  %s1202, 128, %s1204, %s1184
        $region68: #{tpu_custom_call.1} parent=63 // pred_fallthru
          _
        // Predicated region
        $region69: #{tpu_custom_call.1} parent=63 // pred_check
          %p1207 = pneg %p310
        $region70: #{tpu_custom_call.1} parent=63 // pred_check_branch
          %1209 = sbr.rel (%p1207) target = $region72
        $region71: #{tpu_custom_call.1} parent=63 // pred_region
          %1211 = vsyncadd %s1189, 0
          %s1212 = smul.addr %s30, 8
          %s1213 = scalar_lea.hbm %s12, %s1212
          %s1215 = sshll.u32 %s1192, 4
          %s1216 = int_to_ptr.vmem [resolvable:$true] %s1215
          %s1217 = sshll.u32 %s1213, 4
          %s1218 = int_to_ptr.hbm [resolvable:$true] %s1217
          %1220 = dma.vmem_to_hbm [thread:$0]  %s1216, 128, %s1218, %s1189
        $region72: #{tpu_custom_call.1} parent=63 // pred_fallthru
          _
      $region64: #{tpu_custom_call.1} parent=5 // pred_fallthru
        _
      %p1221 = scmp.le.s32.totalorder 2, %s25
      // Predicated region
      $region73: #{tpu_custom_call.1} parent=5 // pred_check
        %p1222 = pneg %p1221
      $region74: #{tpu_custom_call.1} parent=5 // pred_check_branch
        %1224 = sbr.rel (%p1222) target = $region76
      $region75: #{tpu_custom_call.1} parent=5 // pred_region
        %s1225 = ssub.s32 %s25, 2
        // Predicated region
        $region77: #{tpu_custom_call.1} parent=75 // pred_check
          %p1226 = pneg %p290
        $region78: #{tpu_custom_call.1} parent=75 // pred_check_branch
          %1228 = sbr.rel (%p1226) target = $region80
        $region79: #{tpu_custom_call.1} parent=75 // pred_region
          %s1229 = sand.u32 %s275, 1
          %s1230 = scalar_lea.sflag [#allocation3], %s1229
          %s1231 = sand.u32 %s275, 1
          %s1232 = smul.addr %s1231, 8
          %s1233 = scalar_lea.vmem [#allocation2], %s1232
          %1235 = dma.done %s1230, 128
        $region80: #{tpu_custom_call.1} parent=75 // pred_fallthru
          _
        // Predicated region
        $region81: #{tpu_custom_call.1} parent=75 // pred_check
          %p1236 = pneg %p316
        $region82: #{tpu_custom_call.1} parent=75 // pred_check_branch
          %1238 = sbr.rel (%p1236) target = $region84
        $region83: #{tpu_custom_call.1} parent=75 // pred_region
          %s1239 = sand.u32 %s301, 1
          %s1240 = scalar_lea.sflag [#allocation5], %s1239
          %s1241 = sand.u32 %s301, 1
          %s1242 = smul.addr %s1241, 8
          %s1243 = scalar_lea.vmem [#allocation4], %s1242
          %1245 = dma.done %s1240, 128
        $region84: #{tpu_custom_call.1} parent=75 // pred_fallthru
          _
      $region76: #{tpu_custom_call.1} parent=5 // pred_fallthru
        _
    $region6: #{tpu_custom_call.1} parent=1 // loop_footer
      %s29 = sadd.s32 1, %s25
    $region7: #{tpu_custom_call.1} parent=1 // loop_footer_branch
      %24 = sbr.rel target = $region3
    $region8: #{tpu_custom_call.1} parent=1 // loop_exit
      _
    %1246 = vsyncpa [#allocation3], 1
    %s1247 = scalar_lea.sflag [#allocation3], 1
    %1248 = vsyncpa %s1247, 1
    %1249 = vsyncpa [#allocation5], 1
    %s1250 = scalar_lea.sflag [#allocation5], 1
    %1251 = vsyncpa %s1250, 1

</llo_original>
